<compile_context>
chip_gen: v5e
topology: v5e:2x2
jax: 0.10.0
libtpu: 0.0.40
codegen_flags: <defaults>
</compile_context>

<pallas_src>
import functools

import jax
import jax.numpy as jnp
from jax import lax
from jax.experimental import pallas as pl
from jax.experimental.pallas import tpu as pltpu

# ----------------- hyperparameters (scaled-down from the PyTorch spec) -----------------
N_EMBED = 64          # n_embed (512 in the original)
BLOCK_SIZE = 16       # block_size (256 in the original)
N_HEADS = 4           # n_heads (32 in the original)
N_LAYER = 2           # n_layer (8 in the original)
NVOCAB = 65           # Shakespeare charset size (synthetic here)
HEAD_SIZE = N_EMBED // N_HEADS
LN_EPS = 1e-5         # PyTorch nn.LayerNorm default
VOCAB_PAD = 128       # pad lane dim of the LM head to a 128 multiple

_COMPILER_PARAMS = pltpu.CompilerParams(
    dimension_semantics=("parallel",),
    vmem_limit_bytes=32 * 1024 * 1024,   # explicit: v5e scoped default is only 16 MiB
)


def _layernorm(x, gamma, beta):
    """In-kernel LayerNorm over the last axis (biased variance, torch semantics). f32."""
    mean = jnp.mean(x, axis=-1, keepdims=True)
    xc = x - mean
    var = jnp.mean(xc * xc, axis=-1, keepdims=True)
    return xc * lax.rsqrt(var + LN_EPS) * gamma + beta


# ----------------- fused transformer-layer kernel (attention + FFN) -----------------
def _layer_kernel(x_ref, g1_ref, b1_ref, wqkv_ref, wproj_ref, bproj_ref,
                  g2_ref, b2_ref, w1_ref, bf1_ref, w2_ref, bf2_ref, o_ref,
                  *, n_heads, head_size):
    """One full decoder block for one batch element:
       x = x + proj(MHA(LN1(x)));  out = x + ReLU(ReLU(LN2(x) W1 + b1) W2 + b2)."""
    x = x_ref[0].astype(jnp.float32)                          # (T, C) f32
    T = x.shape[0]
    C = n_heads * head_size
    scale = head_size ** (-0.5)

    # ---- attention sublayer ----
    h = _layernorm(x, g1_ref[...], b1_ref[...])               # (T, C) f32
    qkv = jnp.dot(h.astype(jnp.bfloat16), wqkv_ref[...],
                  preferred_element_type=jnp.float32)         # (T, 3C), f32 accumulate

    qf = qkv[:, :C] * scale                                   # fold 1/sqrt(D) into q
    kf = qkv[:, C:2 * C]
    vf = qkv[:, 2 * C:]

    def split_heads(w):                                       # (T, C) -> (H, T, D) bf16
        return jnp.stack(
            [w[:, hd * head_size:(hd + 1) * head_size] for hd in range(n_heads)],
            axis=0).astype(jnp.bfloat16)

    q = split_heads(qf)                                       # (H, T, D)
    k = split_heads(kf)
    v = split_heads(vf)

    # Head-batched score matmul (leading batch dim, contraction over D; no k.T).
    s = jnp.einsum('htd,hsd->hts', q, k,
                   preferred_element_type=jnp.float32)        # (H, T, T) f32

    row = lax.broadcasted_iota(jnp.int32, (T, T), 0)
    col = lax.broadcasted_iota(jnp.int32, (T, T), 1)
    s = jnp.where((col <= row)[None, :, :], s, -1e30)         # finite causal mask (NaN-safe)
    s = s - jnp.max(s, axis=-1, keepdims=True)
    p = jnp.exp(s)
    p = p * pl.reciprocal(jnp.sum(p, axis=-1, keepdims=True), approx=True)

    # Head-batched PV matmul.
    attn = jnp.einsum('hts,hsd->htd', p.astype(jnp.bfloat16), v,
                      preferred_element_type=jnp.float32)     # (H, T, D) f32

    # Re-assemble heads lane-dense and do a single K=C output projection.
    attn = jnp.concatenate([attn[hd] for hd in range(n_heads)], axis=-1)  # (T, C)
    y = jnp.dot(attn.astype(jnp.bfloat16), wproj_ref[...],
                preferred_element_type=jnp.float32) + bproj_ref[...]
    x = x + y                                                 # residual (f32)

    # ---- feed-forward sublayer (matches FForward: Linear-ReLU-Linear-ReLU) ----
    h = _layernorm(x, g2_ref[...], b2_ref[...])
    h = jnp.dot(h.astype(jnp.bfloat16), w1_ref[...],
                preferred_element_type=jnp.float32) + bf1_ref[...]
    h = jnp.maximum(h, 0.0)
    h = jnp.dot(h.astype(jnp.bfloat16), w2_ref[...],
                preferred_element_type=jnp.float32) + bf2_ref[...]
    h = jnp.maximum(h, 0.0)                                   # 2nd ReLU per reference
    o_ref[0] = (x + h).astype(o_ref.dtype)


def _const_spec(shape):
    nd = len(shape)
    return pl.BlockSpec(shape, lambda b: (0,) * nd)


def transformer_layer(x, blk):
    """x: (B, T, C) -> (B, T, C); one fused decoder block per batch element."""
    B, T, C = x.shape
    F = 4 * C
    xspec = pl.BlockSpec((1, T, C), lambda b: (b, 0, 0))
    return pl.pallas_call(
        functools.partial(_layer_kernel, n_heads=N_HEADS, head_size=HEAD_SIZE),
        out_shape=jax.ShapeDtypeStruct((B, T, C), x.dtype),
        grid=(B,),
        in_specs=[
            xspec,
            _const_spec((1, C)), _const_spec((1, C)),          # ln1 gamma / beta
            _const_spec((C, 3 * C)),                           # fused Wqkv (bf16)
            _const_spec((C, C)), _const_spec((1, C)),          # Wproj (bf16), bproj
            _const_spec((1, C)), _const_spec((1, C)),          # ln2 gamma / beta
            _const_spec((C, F)), _const_spec((1, F)),          # W_ff1 (bf16), b_ff1
            _const_spec((F, C)), _const_spec((1, C)),          # W_ff2 (bf16), b_ff2
        ],
        out_specs=xspec,
        compiler_params=_COMPILER_PARAMS,
    )(x,
      blk["ln1_g"].reshape(1, C), blk["ln1_b"].reshape(1, C),
      blk["wqkv"], blk["w_proj"], blk["b_proj"].reshape(1, C),
      blk["ln2_g"].reshape(1, C), blk["ln2_b"].reshape(1, C),
      blk["w_ff1"], blk["b_ff1"].reshape(1, F),
      blk["w_ff2"], blk["b_ff2"].reshape(1, C))


# ----------------- fused final LayerNorm + LM head kernel -----------------
def _lm_head_kernel(x_ref, g_ref, b_ref, w_ref, bo_ref, o_ref):
    x = x_ref[0].astype(jnp.float32)                          # (T, C)
    h = _layernorm(x, g_ref[...], b_ref[...])
    y = jnp.dot(h.astype(jnp.bfloat16), w_ref[...],
                preferred_element_type=jnp.float32) + bo_ref[...]
    o_ref[0] = y.astype(o_ref.dtype)


def lm_head(x, gamma, beta, w_out_p, b_out_p):
    """x: (B, T, C) -> (B, T, VOCAB_PAD) logits (lane-dense; pad sliced off outside)."""
    B, T, C = x.shape
    V = w_out_p.shape[1]
    return pl.pallas_call(
        _lm_head_kernel,
        out_shape=jax.ShapeDtypeStruct((B, T, V), x.dtype),
        grid=(B,),
        in_specs=[
            pl.BlockSpec((1, T, C), lambda b: (b, 0, 0)),
            _const_spec((1, C)), _const_spec((1, C)),
            _const_spec((C, V)), _const_spec((1, V)),
        ],
        out_specs=pl.BlockSpec((1, T, V), lambda b: (b, 0, 0)),
        compiler_params=_COMPILER_PARAMS,
    )(x, gamma.reshape(1, C), beta.reshape(1, C), w_out_p, b_out_p.reshape(1, V))


# ----------------- model (glue in plain JAX, hot paths in Pallas) -----------------
def init_params(key):
    keys = iter(jax.random.split(key, 3 + 4 * N_LAYER))

    def nrm(shape, std=0.02):
        return jax.random.normal(next(keys), shape, jnp.float32) * std

    C = N_EMBED
    # LM head weights, lane-padded to 128 (padding columns zero; sliced off later).
    w_out = nrm((C, NVOCAB))
    w_out_p = (jnp.zeros((C, VOCAB_PAD), jnp.float32)
               .at[:, :NVOCAB].set(w_out)).astype(jnp.bfloat16)

    params = {
        "tok_emb": nrm((NVOCAB, C)),
        "pos_emb": nrm((BLOCK_SIZE, C)),
        "blocks": [],
        "ln_f_g": jnp.ones((C,), jnp.float32),
        "ln_f_b": jnp.zeros((C,), jnp.float32),
        "w_out_p": w_out_p,                              # bf16 MXU operand
        "b_out_p": jnp.zeros((VOCAB_PAD,), jnp.float32),
    }
    for _ in range(N_LAYER):
        params["blocks"].append({
            "ln1_g": jnp.ones((C,), jnp.float32),
            "ln1_b": jnp.zeros((C,), jnp.float32),
            "ln2_g": jnp.ones((C,), jnp.float32),
            "ln2_b": jnp.zeros((C,), jnp.float32),
            # fused q|k|v weights (per-head Linears concatenated; bias=False), bf16
            "wqkv": nrm((C, 3 * C)).astype(jnp.bfloat16),
            "w_proj": nrm((C, C)).astype(jnp.bfloat16),
            "b_proj": jnp.zeros((C,), jnp.float32),
            "w_ff1": nrm((C, 4 * C)).astype(jnp.bfloat16),
            "b_ff1": jnp.zeros((4 * C,), jnp.float32),
            "w_ff2": nrm((4 * C, C)).astype(jnp.bfloat16),
            "b_ff2": jnp.zeros((C,), jnp.float32),
        })
    return params


def gpt_forward(params, idx, target=None):
    B, T = idx.shape
    # embedding gathers are glue (plain JAX)
    tok_embed = jnp.take(params["tok_emb"], idx, axis=0)       # (B, T, C)
    pos_embed = params["pos_emb"][:T]                          # (T, C)
    x = tok_embed + pos_embed[None, :, :]

    for blk in params["blocks"]:
        x = transformer_layer(x, blk)                          # fused attn + FFN layer

    logits_p = lm_head(x, params["ln_f_g"], params["ln_f_b"],
                       params["w_out_p"], params["b_out_p"])
    logits = logits_p[:, :, :NVOCAB]

    loss = None  # TODO(synk): cross-entropy loss path not exercised (target is None)
    return logits, loss


if __name__ == "__main__":
    key = jax.random.PRNGKey(0)
    pkey, ikey = jax.random.split(key)
    params = init_params(pkey)

    B, T = 2, 8  # T <= BLOCK_SIZE
    idx = jax.random.randint(ikey, (B, T), 0, NVOCAB, dtype=jnp.int32)

    logits, loss = gpt_forward(params, idx)
    logits = jax.block_until_ready(logits)

    assert logits.shape == (B, T, NVOCAB), logits.shape
    assert logits.dtype == jnp.float32
    assert bool(jnp.all(jnp.isfinite(logits)))
    print("KERNEL_OK")
</pallas_src>

<mosaic_0001>
module attributes {stable_mosaic.version = 11 : i64} {
  func.func @_layer_kernel(%arg0: i32, %arg1: memref<1x8x64xf32, #tpu.memory_space<vmem>>, %arg2: memref<1x64xf32, #tpu.memory_space<vmem>>, %arg3: memref<1x64xf32, #tpu.memory_space<vmem>>, %arg4: memref<64x192xbf16, #tpu.memory_space<vmem>>, %arg5: memref<64x64xbf16, #tpu.memory_space<vmem>>, %arg6: memref<1x64xf32, #tpu.memory_space<vmem>>, %arg7: memref<1x64xf32, #tpu.memory_space<vmem>>, %arg8: memref<1x64xf32, #tpu.memory_space<vmem>>, %arg9: memref<64x256xbf16, #tpu.memory_space<vmem>>, %arg10: memref<1x256xf32, #tpu.memory_space<vmem>>, %arg11: memref<256x64xbf16, #tpu.memory_space<vmem>>, %arg12: memref<1x64xf32, #tpu.memory_space<vmem>>, %arg13: memref<1x8x64xf32, #tpu.memory_space<vmem>>) attributes {dimension_semantics = [#tpu.dimension_semantics<parallel>], iteration_bounds = array<i64: 2>, scalar_prefetch = 0 : i64, scratch_operands = 0 : i64, tpu.core_type = #tpu.core_type<tc>, window_params = [{transform_indices = @transform_0, window_bounds = array<i64: 1, 8, 64>}, {pipeline_mode = #tpu.pipeline_mode<synchronous>, transform_indices = @transform_1, window_bounds = array<i64: 1, 64>}, {pipeline_mode = #tpu.pipeline_mode<synchronous>, transform_indices = @transform_2, window_bounds = array<i64: 1, 64>}, {pipeline_mode = #tpu.pipeline_mode<synchronous>, transform_indices = @transform_3, window_bounds = array<i64: 64, 192>}, {pipeline_mode = #tpu.pipeline_mode<synchronous>, transform_indices = @transform_4, window_bounds = array<i64: 64, 64>}, {pipeline_mode = #tpu.pipeline_mode<synchronous>, transform_indices = @transform_5, window_bounds = array<i64: 1, 64>}, {pipeline_mode = #tpu.pipeline_mode<synchronous>, transform_indices = @transform_6, window_bounds = array<i64: 1, 64>}, {pipeline_mode = #tpu.pipeline_mode<synchronous>, transform_indices = @transform_7, window_bounds = array<i64: 1, 64>}, {pipeline_mode = #tpu.pipeline_mode<synchronous>, transform_indices = @transform_8, window_bounds = array<i64: 64, 256>}, {pipeline_mode = #tpu.pipeline_mode<synchronous>, transform_indices = @transform_9, window_bounds = array<i64: 1, 256>}, {pipeline_mode = #tpu.pipeline_mode<synchronous>, transform_indices = @transform_10, window_bounds = array<i64: 256, 64>}, {pipeline_mode = #tpu.pipeline_mode<synchronous>, transform_indices = @transform_11, window_bounds = array<i64: 1, 64>}, {transform_indices = @transform_12, window_bounds = array<i64: 1, 8, 64>}]} {
    %c0 = arith.constant 0 : index
    %c0_0 = arith.constant 0 : index
    %c0_1 = arith.constant 0 : index
    %0 = vector.load %arg1[%c0, %c0_0, %c0_1] : memref<1x8x64xf32, #tpu.memory_space<vmem>>, vector<1x8x64xf32>
    %1 = vector.shape_cast %0 : vector<1x8x64xf32> to vector<8x64xf32>
    %c0_2 = arith.constant 0 : index
    %c0_3 = arith.constant 0 : index
    %2 = vector.load %arg2[%c0_2, %c0_3] : memref<1x64xf32, #tpu.memory_space<vmem>>, vector<1x64xf32>
    %c0_4 = arith.constant 0 : index
    %c0_5 = arith.constant 0 : index
    %3 = vector.load %arg3[%c0_4, %c0_5] : memref<1x64xf32, #tpu.memory_space<vmem>>, vector<1x64xf32>
    %cst = arith.constant dense<0.000000e+00> : vector<8xf32>
    %4 = vector.multi_reduction <add>, %1, %cst [1] : vector<8x64xf32> to vector<8xf32>
    %5 = vector.shape_cast %4 : vector<8xf32> to vector<8x1xf32>
    %cst_6 = arith.constant 6.400000e+01 : f32
    %6 = vector.broadcast %cst_6 : f32 to vector<8x1xf32>
    %7 = arith.divf %5, %6 : vector<8x1xf32>
    %8 = vector.broadcast %7 : vector<8x1xf32> to vector<8x64xf32>
    %9 = arith.subf %1, %8 : vector<8x64xf32>
    %10 = arith.mulf %9, %9 : vector<8x64xf32>
    %cst_7 = arith.constant dense<0.000000e+00> : vector<8xf32>
    %11 = vector.multi_reduction <add>, %10, %cst_7 [1] : vector<8x64xf32> to vector<8xf32>
    %12 = vector.shape_cast %11 : vector<8xf32> to vector<8x1xf32>
    %cst_8 = arith.constant 6.400000e+01 : f32
    %13 = vector.broadcast %cst_8 : f32 to vector<8x1xf32>
    %14 = arith.divf %12, %13 : vector<8x1xf32>
    %cst_9 = arith.constant 9.99999974E-6 : f32
    %15 = vector.broadcast %cst_9 : f32 to vector<8x1xf32>
    %16 = arith.addf %14, %15 : vector<8x1xf32>
    %17 = math.rsqrt %16 : vector<8x1xf32>
    %18 = vector.broadcast %17 : vector<8x1xf32> to vector<8x64xf32>
    %19 = arith.mulf %9, %18 : vector<8x64xf32>
    %20 = vector.broadcast %2 : vector<1x64xf32> to vector<8x64xf32>
    %21 = arith.mulf %19, %20 : vector<8x64xf32>
    %22 = vector.broadcast %3 : vector<1x64xf32> to vector<8x64xf32>
    %23 = arith.addf %21, %22 : vector<8x64xf32>
    %24 = arith.truncf %23 : vector<8x64xf32> to vector<8x64xbf16>
    %c0_10 = arith.constant 0 : index
    %c0_11 = arith.constant 0 : index
    %25 = vector.load %arg4[%c0_10, %c0_11] : memref<64x192xbf16, #tpu.memory_space<vmem>>, vector<64x192xbf16>
    %cst_12 = arith.constant dense<0.000000e+00> : vector<8x192xf32>
    %26 = tpu.matmul %24, %25, %cst_12 {dimension_numbers = #tpu.dot_dimension_numbers<[1], [0], [0], [1], [0, 0, 1, 1], [], []>} : vector<8x64xbf16>, vector<64x192xbf16>, vector<8x192xf32> -> vector<8x192xf32>
    %27 = vector.extract_strided_slice %26 {offsets = [0, 0], sizes = [8, 64], strides = [1, 1]} : vector<8x192xf32> to vector<8x64xf32>
    %cst_13 = arith.constant 2.500000e-01 : f32
    %28 = vector.broadcast %cst_13 : f32 to vector<8x64xf32>
    %29 = arith.mulf %27, %28 : vector<8x64xf32>
    %30 = vector.extract_strided_slice %26 {offsets = [0, 64], sizes = [8, 64], strides = [1, 1]} : vector<8x192xf32> to vector<8x64xf32>
    %31 = vector.extract_strided_slice %26 {offsets = [0, 128], sizes = [8, 64], strides = [1, 1]} : vector<8x192xf32> to vector<8x64xf32>
    %32 = vector.extract_strided_slice %29 {offsets = [0, 0], sizes = [8, 16], strides = [1, 1]} : vector<8x64xf32> to vector<8x16xf32>
    %33 = vector.extract_strided_slice %29 {offsets = [0, 16], sizes = [8, 16], strides = [1, 1]} : vector<8x64xf32> to vector<8x16xf32>
    %34 = vector.extract_strided_slice %29 {offsets = [0, 32], sizes = [8, 16], strides = [1, 1]} : vector<8x64xf32> to vector<8x16xf32>
    %35 = vector.extract_strided_slice %29 {offsets = [0, 48], sizes = [8, 16], strides = [1, 1]} : vector<8x64xf32> to vector<8x16xf32>
    %36 = vector.shape_cast %32 : vector<8x16xf32> to vector<1x8x16xf32>
    %37 = vector.shape_cast %33 : vector<8x16xf32> to vector<1x8x16xf32>
    %38 = vector.shape_cast %34 : vector<8x16xf32> to vector<1x8x16xf32>
    %39 = vector.shape_cast %35 : vector<8x16xf32> to vector<1x8x16xf32>
    %40 = tpu.concatenate %36, %37, %38, %39 in 0 : vector<1x8x16xf32>, vector<1x8x16xf32>, vector<1x8x16xf32>, vector<1x8x16xf32> -> vector<4x8x16xf32>
    %41 = arith.truncf %40 : vector<4x8x16xf32> to vector<4x8x16xbf16>
    %42 = vector.extract_strided_slice %30 {offsets = [0, 0], sizes = [8, 16], strides = [1, 1]} : vector<8x64xf32> to vector<8x16xf32>
    %43 = vector.extract_strided_slice %30 {offsets = [0, 16], sizes = [8, 16], strides = [1, 1]} : vector<8x64xf32> to vector<8x16xf32>
    %44 = vector.extract_strided_slice %30 {offsets = [0, 32], sizes = [8, 16], strides = [1, 1]} : vector<8x64xf32> to vector<8x16xf32>
    %45 = vector.extract_strided_slice %30 {offsets = [0, 48], sizes = [8, 16], strides = [1, 1]} : vector<8x64xf32> to vector<8x16xf32>
    %46 = vector.shape_cast %42 : vector<8x16xf32> to vector<1x8x16xf32>
    %47 = vector.shape_cast %43 : vector<8x16xf32> to vector<1x8x16xf32>
    %48 = vector.shape_cast %44 : vector<8x16xf32> to vector<1x8x16xf32>
    %49 = vector.shape_cast %45 : vector<8x16xf32> to vector<1x8x16xf32>
    %50 = tpu.concatenate %46, %47, %48, %49 in 0 : vector<1x8x16xf32>, vector<1x8x16xf32>, vector<1x8x16xf32>, vector<1x8x16xf32> -> vector<4x8x16xf32>
    %51 = arith.truncf %50 : vector<4x8x16xf32> to vector<4x8x16xbf16>
    %52 = vector.extract_strided_slice %31 {offsets = [0, 0], sizes = [8, 16], strides = [1, 1]} : vector<8x64xf32> to vector<8x16xf32>
    %53 = vector.extract_strided_slice %31 {offsets = [0, 16], sizes = [8, 16], strides = [1, 1]} : vector<8x64xf32> to vector<8x16xf32>
    %54 = vector.extract_strided_slice %31 {offsets = [0, 32], sizes = [8, 16], strides = [1, 1]} : vector<8x64xf32> to vector<8x16xf32>
    %55 = vector.extract_strided_slice %31 {offsets = [0, 48], sizes = [8, 16], strides = [1, 1]} : vector<8x64xf32> to vector<8x16xf32>
    %56 = vector.shape_cast %52 : vector<8x16xf32> to vector<1x8x16xf32>
    %57 = vector.shape_cast %53 : vector<8x16xf32> to vector<1x8x16xf32>
    %58 = vector.shape_cast %54 : vector<8x16xf32> to vector<1x8x16xf32>
    %59 = vector.shape_cast %55 : vector<8x16xf32> to vector<1x8x16xf32>
    %60 = tpu.concatenate %56, %57, %58, %59 in 0 : vector<1x8x16xf32>, vector<1x8x16xf32>, vector<1x8x16xf32>, vector<1x8x16xf32> -> vector<4x8x16xf32>
    %61 = arith.truncf %60 : vector<4x8x16xf32> to vector<4x8x16xbf16>
    "tpu.trace_start"() <{level = 10 : i32, message = "htd,hsd->hts"}> : () -> ()
    %cst_14 = arith.constant dense<0.000000e+00> : vector<4x8x8xf32>
    %62 = tpu.matmul %41, %51, %cst_14 {dimension_numbers = #tpu.dot_dimension_numbers<[2], [2], [1], [1], [0, 0, 0, 1, 1, 1], [0], [0]>} : vector<4x8x16xbf16>, vector<4x8x16xbf16>, vector<4x8x8xf32> -> vector<4x8x8xf32>
    "tpu.trace_stop"() : () -> ()
    %63 = tpu.iota {dimensions = array<i32: 0>} : vector<8x8xi32>
    %64 = tpu.iota {dimensions = array<i32: 1>} : vector<8x8xi32>
    %65 = arith.cmpi sle, %64, %63 : vector<8x8xi32>
    %66 = vector.shape_cast %65 : vector<8x8xi1> to vector<1x8x8xi1>
    %cst_15 = arith.constant -1.000000e+30 : f32
    %67 = vector.shape_cast %66 : vector<1x8x8xi1> to vector<1x8x8xi1>
    %68 = vector.broadcast %67 : vector<1x8x8xi1> to vector<4x8x8xi1>
    %69 = vector.broadcast %cst_15 : f32 to vector<4x8x8xf32>
    %70 = arith.select %68, %62, %69 : vector<4x8x8xi1>, vector<4x8x8xf32>
    %cst_16 = arith.constant dense<0xFF800000> : vector<4x8xf32>
    %71 = vector.multi_reduction <maximumf>, %70, %cst_16 [2] : vector<4x8x8xf32> to vector<4x8xf32>
    %72 = vector.shape_cast %71 : vector<4x8xf32> to vector<4x8x1xf32>
    %73 = vector.broadcast %72 : vector<4x8x1xf32> to vector<4x8x8xf32>
    %74 = arith.subf %70, %73 : vector<4x8x8xf32>
    %75 = math.exp %74 : vector<4x8x8xf32>
    %cst_17 = arith.constant dense<0.000000e+00> : vector<4x8xf32>
    %76 = vector.multi_reduction <add>, %75, %cst_17 [2] : vector<4x8x8xf32> to vector<4x8xf32>
    %77 = vector.shape_cast %76 : vector<4x8xf32> to vector<4x8x1xf32>
    %78 = tpu.reciprocal %77 {approx = true} : vector<4x8x1xf32> -> vector<4x8x1xf32>
    %79 = vector.broadcast %78 : vector<4x8x1xf32> to vector<4x8x8xf32>
    %80 = arith.mulf %75, %79 : vector<4x8x8xf32>
    %81 = arith.truncf %80 : vector<4x8x8xf32> to vector<4x8x8xbf16>
    "tpu.trace_start"() <{level = 10 : i32, message = "hts,hsd->htd"}> : () -> ()
    %cst_18 = arith.constant dense<0.000000e+00> : vector<4x8x16xf32>
    %82 = tpu.matmul %81, %61, %cst_18 {dimension_numbers = #tpu.dot_dimension_numbers<[2], [1], [1], [2], [0, 0, 0, 1, 1, 2], [0], [0]>} : vector<4x8x8xbf16>, vector<4x8x16xbf16>, vector<4x8x16xf32> -> vector<4x8x16xf32>
    "tpu.trace_stop"() : () -> ()
    %83 = vector.extract_strided_slice %82 {offsets = [0, 0, 0], sizes = [1, 8, 16], strides = [1, 1, 1]} : vector<4x8x16xf32> to vector<1x8x16xf32>
    %84 = vector.shape_cast %83 : vector<1x8x16xf32> to vector<8x16xf32>
    %85 = vector.extract_strided_slice %82 {offsets = [1, 0, 0], sizes = [1, 8, 16], strides = [1, 1, 1]} : vector<4x8x16xf32> to vector<1x8x16xf32>
    %86 = vector.shape_cast %85 : vector<1x8x16xf32> to vector<8x16xf32>
    %87 = vector.extract_strided_slice %82 {offsets = [2, 0, 0], sizes = [1, 8, 16], strides = [1, 1, 1]} : vector<4x8x16xf32> to vector<1x8x16xf32>
    %88 = vector.shape_cast %87 : vector<1x8x16xf32> to vector<8x16xf32>
    %89 = vector.extract_strided_slice %82 {offsets = [3, 0, 0], sizes = [1, 8, 16], strides = [1, 1, 1]} : vector<4x8x16xf32> to vector<1x8x16xf32>
    %90 = vector.shape_cast %89 : vector<1x8x16xf32> to vector<8x16xf32>
    %91 = tpu.concatenate %84, %86, %88, %90 in 1 : vector<8x16xf32>, vector<8x16xf32>, vector<8x16xf32>, vector<8x16xf32> -> vector<8x64xf32>
    %92 = arith.truncf %91 : vector<8x64xf32> to vector<8x64xbf16>
    %c0_19 = arith.constant 0 : index
    %c0_20 = arith.constant 0 : index
    %93 = vector.load %arg5[%c0_19, %c0_20] : memref<64x64xbf16, #tpu.memory_space<vmem>>, vector<64x64xbf16>
    %cst_21 = arith.constant dense<0.000000e+00> : vector<8x64xf32>
    %94 = tpu.matmul %92, %93, %cst_21 {dimension_numbers = #tpu.dot_dimension_numbers<[1], [0], [0], [1], [0, 0, 1, 1], [], []>} : vector<8x64xbf16>, vector<64x64xbf16>, vector<8x64xf32> -> vector<8x64xf32>
    %c0_22 = arith.constant 0 : index
    %c0_23 = arith.constant 0 : index
    %95 = vector.load %arg6[%c0_22, %c0_23] : memref<1x64xf32, #tpu.memory_space<vmem>>, vector<1x64xf32>
    %96 = vector.broadcast %95 : vector<1x64xf32> to vector<8x64xf32>
    %97 = arith.addf %94, %96 : vector<8x64xf32>
    %98 = arith.addf %1, %97 : vector<8x64xf32>
    %c0_24 = arith.constant 0 : index
    %c0_25 = arith.constant 0 : index
    %99 = vector.load %arg7[%c0_24, %c0_25] : memref<1x64xf32, #tpu.memory_space<vmem>>, vector<1x64xf32>
    %c0_26 = arith.constant 0 : index
    %c0_27 = arith.constant 0 : index
    %100 = vector.load %arg8[%c0_26, %c0_27] : memref<1x64xf32, #tpu.memory_space<vmem>>, vector<1x64xf32>
    %cst_28 = arith.constant dense<0.000000e+00> : vector<8xf32>
    %101 = vector.multi_reduction <add>, %98, %cst_28 [1] : vector<8x64xf32> to vector<8xf32>
    %102 = vector.shape_cast %101 : vector<8xf32> to vector<8x1xf32>
    %cst_29 = arith.constant 6.400000e+01 : f32
    %103 = vector.broadcast %cst_29 : f32 to vector<8x1xf32>
    %104 = arith.divf %102, %103 : vector<8x1xf32>
    %105 = vector.broadcast %104 : vector<8x1xf32> to vector<8x64xf32>
    %106 = arith.subf %98, %105 : vector<8x64xf32>
    %107 = arith.mulf %106, %106 : vector<8x64xf32>
    %cst_30 = arith.constant dense<0.000000e+00> : vector<8xf32>
    %108 = vector.multi_reduction <add>, %107, %cst_30 [1] : vector<8x64xf32> to vector<8xf32>
    %109 = vector.shape_cast %108 : vector<8xf32> to vector<8x1xf32>
    %cst_31 = arith.constant 6.400000e+01 : f32
    %110 = vector.broadcast %cst_31 : f32 to vector<8x1xf32>
    %111 = arith.divf %109, %110 : vector<8x1xf32>
    %cst_32 = arith.constant 9.99999974E-6 : f32
    %112 = vector.broadcast %cst_32 : f32 to vector<8x1xf32>
    %113 = arith.addf %111, %112 : vector<8x1xf32>
    %114 = math.rsqrt %113 : vector<8x1xf32>
    %115 = vector.broadcast %114 : vector<8x1xf32> to vector<8x64xf32>
    %116 = arith.mulf %106, %115 : vector<8x64xf32>
    %117 = vector.broadcast %99 : vector<1x64xf32> to vector<8x64xf32>
    %118 = arith.mulf %116, %117 : vector<8x64xf32>
    %119 = vector.broadcast %100 : vector<1x64xf32> to vector<8x64xf32>
    %120 = arith.addf %118, %119 : vector<8x64xf32>
    %121 = arith.truncf %120 : vector<8x64xf32> to vector<8x64xbf16>
    %c0_33 = arith.constant 0 : index
    %c0_34 = arith.constant 0 : index
    %122 = vector.load %arg9[%c0_33, %c0_34] : memref<64x256xbf16, #tpu.memory_space<vmem>>, vector<64x256xbf16>
    %cst_35 = arith.constant dense<0.000000e+00> : vector<8x256xf32>
    %123 = tpu.matmul %121, %122, %cst_35 {dimension_numbers = #tpu.dot_dimension_numbers<[1], [0], [0], [1], [0, 0, 1, 1], [], []>} : vector<8x64xbf16>, vector<64x256xbf16>, vector<8x256xf32> -> vector<8x256xf32>
    %c0_36 = arith.constant 0 : index
    %c0_37 = arith.constant 0 : index
    %124 = vector.load %arg10[%c0_36, %c0_37] : memref<1x256xf32, #tpu.memory_space<vmem>>, vector<1x256xf32>
    %125 = vector.broadcast %124 : vector<1x256xf32> to vector<8x256xf32>
    %126 = arith.addf %123, %125 : vector<8x256xf32>
    %cst_38 = arith.constant 0.000000e+00 : f32
    %127 = vector.broadcast %cst_38 : f32 to vector<8x256xf32>
    %128 = arith.maximumf %126, %127 : vector<8x256xf32>
    %129 = arith.truncf %128 : vector<8x256xf32> to vector<8x256xbf16>
    %c0_39 = arith.constant 0 : index
    %c0_40 = arith.constant 0 : index
    %130 = vector.load %arg11[%c0_39, %c0_40] : memref<256x64xbf16, #tpu.memory_space<vmem>>, vector<256x64xbf16>
    %cst_41 = arith.constant dense<0.000000e+00> : vector<8x64xf32>
    %131 = tpu.matmul %129, %130, %cst_41 {dimension_numbers = #tpu.dot_dimension_numbers<[1], [0], [0], [1], [0, 0, 1, 1], [], []>} : vector<8x256xbf16>, vector<256x64xbf16>, vector<8x64xf32> -> vector<8x64xf32>
    %c0_42 = arith.constant 0 : index
    %c0_43 = arith.constant 0 : index
    %132 = vector.load %arg12[%c0_42, %c0_43] : memref<1x64xf32, #tpu.memory_space<vmem>>, vector<1x64xf32>
    %133 = vector.broadcast %132 : vector<1x64xf32> to vector<8x64xf32>
    %134 = arith.addf %131, %133 : vector<8x64xf32>
    %cst_44 = arith.constant 0.000000e+00 : f32
    %135 = vector.broadcast %cst_44 : f32 to vector<8x64xf32>
    %136 = arith.maximumf %134, %135 : vector<8x64xf32>
    %137 = arith.addf %98, %136 : vector<8x64xf32>
    %c0_45 = arith.constant 0 : index
    %c0_46 = arith.constant 0 : index
    %c0_47 = arith.constant 0 : index
    %138 = vector.load %arg13[%c0_45, %c0_46, %c0_47] : memref<1x8x64xf32, #tpu.memory_space<vmem>>, vector<1x8x64xf32>
    %139 = vector.shape_cast %138 : vector<1x8x64xf32> to vector<8x64xf32>
    %140 = vector.shape_cast %137 : vector<8x64xf32> to vector<1x8x64xf32>
    tpu.vector_store %arg13[%c0_45, %c0_46, %c0_47], %140 {strides = array<i32>} : memref<1x8x64xf32, #tpu.memory_space<vmem>>, vector<1x8x64xf32>,
    return
  }
  func.func @transform_0(%arg0: i32) -> (i32, i32, i32) {
    %c0_i32 = arith.constant 0 : i32
    %c0_i32_0 = arith.constant 0 : i32
    %c0_i32_1 = arith.constant 0 : i32
    return %arg0, %c0_i32, %c0_i32_0 : i32, i32, i32
  }
  func.func @transform_1(%arg0: i32) -> (i32, i32) {
    %c0_i32 = arith.constant 0 : i32
    %c0_i32_0 = arith.constant 0 : i32
    %c0_i32_1 = arith.constant 0 : i32
    return %c0_i32, %c0_i32_0 : i32, i32
  }
  func.func @transform_2(%arg0: i32) -> (i32, i32) {
    %c0_i32 = arith.constant 0 : i32
    %c0_i32_0 = arith.constant 0 : i32
    %c0_i32_1 = arith.constant 0 : i32
    return %c0_i32, %c0_i32_0 : i32, i32
  }
  func.func @transform_3(%arg0: i32) -> (i32, i32) {
    %c0_i32 = arith.constant 0 : i32
    %c0_i32_0 = arith.constant 0 : i32
    %c0_i32_1 = arith.constant 0 : i32
    return %c0_i32, %c0_i32_0 : i32, i32
  }
  func.func @transform_4(%arg0: i32) -> (i32, i32) {
    %c0_i32 = arith.constant 0 : i32
    %c0_i32_0 = arith.constant 0 : i32
    %c0_i32_1 = arith.constant 0 : i32
    return %c0_i32, %c0_i32_0 : i32, i32
  }
  func.func @transform_5(%arg0: i32) -> (i32, i32) {
    %c0_i32 = arith.constant 0 : i32
    %c0_i32_0 = arith.constant 0 : i32
    %c0_i32_1 = arith.constant 0 : i32
    return %c0_i32, %c0_i32_0 : i32, i32
  }
  func.func @transform_6(%arg0: i32) -> (i32, i32) {
    %c0_i32 = arith.constant 0 : i32
    %c0_i32_0 = arith.constant 0 : i32
    %c0_i32_1 = arith.constant 0 : i32
    return %c0_i32, %c0_i32_0 : i32, i32
  }
  func.func @transform_7(%arg0: i32) -> (i32, i32) {
    %c0_i32 = arith.constant 0 : i32
    %c0_i32_0 = arith.constant 0 : i32
    %c0_i32_1 = arith.constant 0 : i32
    return %c0_i32, %c0_i32_0 : i32, i32
  }
  func.func @transform_8(%arg0: i32) -> (i32, i32) {
    %c0_i32 = arith.constant 0 : i32
    %c0_i32_0 = arith.constant 0 : i32
    %c0_i32_1 = arith.constant 0 : i32
    return %c0_i32, %c0_i32_0 : i32, i32
  }
  func.func @transform_9(%arg0: i32) -> (i32, i32) {
    %c0_i32 = arith.constant 0 : i32
    %c0_i32_0 = arith.constant 0 : i32
    %c0_i32_1 = arith.constant 0 : i32
    return %c0_i32, %c0_i32_0 : i32, i32
  }
  func.func @transform_10(%arg0: i32) -> (i32, i32) {
    %c0_i32 = arith.constant 0 : i32
    %c0_i32_0 = arith.constant 0 : i32
    %c0_i32_1 = arith.constant 0 : i32
    return %c0_i32, %c0_i32_0 : i32, i32
  }
  func.func @transform_11(%arg0: i32) -> (i32, i32) {
    %c0_i32 = arith.constant 0 : i32
    %c0_i32_0 = arith.constant 0 : i32
    %c0_i32_1 = arith.constant 0 : i32
    return %c0_i32, %c0_i32_0 : i32, i32
  }
  func.func @transform_12(%arg0: i32) -> (i32, i32, i32) {
    %c0_i32 = arith.constant 0 : i32
    %c0_i32_0 = arith.constant 0 : i32
    %c0_i32_1 = arith.constant 0 : i32
    return %arg0, %c0_i32, %c0_i32_0 : i32, i32, i32
  }
}

</mosaic_0001>

<llo_original>
// kernel: tpu_custom_call.1
$region0: #{tpu_custom_call.1}
  #allocation0 [shape = 'u32[]', space=smem, size = 0x4, offset = 0x4, fixed_abs, tag = 'smem constant byte address 0x4 - core index']
  #allocation1 [shape = 'u32[72,128]{1,0:T(1,128)}', space=vmem, size = 0x9000, scoped, tag = 'internal scratch']
  %s0 = inlined_call_operand.vmem [shape: f32[2,8,64], index: 0, kind: input, shape index: {}]
  %s1 = inlined_call_operand.vmem [shape: f32[1,64], index: 1, kind: input, shape index: {}]
  %s2 = inlined_call_operand.vmem [shape: f32[1,64], index: 2, kind: input, shape index: {}]
  %s3 = inlined_call_operand.vmem [shape: bf16[64,192], index: 3, kind: input, shape index: {}]
  %s4 = inlined_call_operand.vmem [shape: bf16[64,64], index: 4, kind: input, shape index: {}]
  %s5 = inlined_call_operand.vmem [shape: f32[1,64], index: 5, kind: input, shape index: {}]
  %s6 = inlined_call_operand.vmem [shape: f32[1,64], index: 6, kind: input, shape index: {}]
  %s7 = inlined_call_operand.vmem [shape: f32[1,64], index: 7, kind: input, shape index: {}]
  %s8 = inlined_call_operand.vmem [shape: bf16[64,256], index: 8, kind: input, shape index: {}]
  %s9 = inlined_call_operand.vmem [shape: f32[1,256], index: 9, kind: input, shape index: {}]
  %s10 = inlined_call_operand.vmem [shape: bf16[256,64], index: 10, kind: input, shape index: {}]
  %s11 = inlined_call_operand.vmem [shape: f32[1,64], index: 11, kind: input, shape index: {}]
  %s12 = inlined_call_operand.hbm [shape: f32[2,8,64], index: 12, kind: output, shape index: {}]
  %s13 = sld [smem:[#allocation0]]
  $region81: #{tpu_custom_call.1} parent=0
    _
  %s15 = ssub.s32 1, %s13
  %s16 = scalar_select 0, %s15, %s13
  $region1: #{tpu_custom_call.1} parent=0
    #allocation2 [shape = 'u8[8192]{0}', space=vmem, size = 0x2000, scoped, tag = 'output window, operand 0']
    #allocation3 [shape = 's32[2]{0}', space=sflag, size = 0x8, scoped, tag = 'scoped memory for tpu_custom_call.1']
    %17 = vsyncpa [#allocation3], 0
    %s18 = scalar_lea.sflag [#allocation3], 1
    %19 = vsyncpa %s18, 0
    loop: start=0, step=1, limit=4
    $region2: #{tpu_custom_call.1} parent=1 // loop_pre_header
      _
    $region3: #{tpu_custom_call.1} parent=1 // loop_header
      %s21 = sphi 0, %s25
      %p22 = scmp.ge.s32.totalorder %s21, 4
      %s31 = sphi 0, %s33
      %s34 = sphi 0, %s31
      %s35 = sphi 0, %s34
      %s51 = sphi 0, %s35
      %s55 = sphi 0, %s55
      %s57 = sphi 0, %s55
      %s58 = sphi 0, %s57
      %s72 = sphi 0, %s58
      %s76 = sphi 0, %s76
      %s78 = sphi 0, %s76
      %s79 = sphi 0, %s78
      %s93 = sphi 0, %s79
      %s97 = sphi 0, %s97
      %s99 = sphi 0, %s97
      %s100 = sphi 0, %s99
      %s114 = sphi 0, %s100
      %s118 = sphi 0, %s118
      %s120 = sphi 0, %s118
      %s121 = sphi 0, %s120
      %s135 = sphi 0, %s121
      %s139 = sphi 0, %s139
      %s141 = sphi 0, %s139
      %s142 = sphi 0, %s141
      %s156 = sphi 0, %s142
      %s160 = sphi 0, %s160
      %s162 = sphi 0, %s160
      %s163 = sphi 0, %s162
      %s177 = sphi 0, %s163
      %s181 = sphi 0, %s181
      %s183 = sphi 0, %s181
      %s184 = sphi 0, %s183
      %s198 = sphi 0, %s184
      %s202 = sphi 0, %s202
      %s204 = sphi 0, %s202
      %s205 = sphi 0, %s204
      %s219 = sphi 0, %s205
      %s223 = sphi 0, %s223
      %s225 = sphi 0, %s223
      %s226 = sphi 0, %s225
      %s240 = sphi 0, %s226
      %s244 = sphi 0, %s244
      %s246 = sphi 0, %s244
      %s247 = sphi 0, %s246
      %s261 = sphi 0, %s247
      %s265 = sphi 0, %s265
      %s267 = sphi 0, %s265
      %s268 = sphi 0, %s267
      %s282 = sphi 0, %s268
      %s288 = sphi 0, %s290
      %s291 = sphi 0, %s288
      %s292 = sphi 0, %s291
      %s308 = sphi 0, %s292
    $region4: #{tpu_custom_call.1} parent=1 // loop_header_branch
      %24 = sbr.rel (%p22) target = $region8
    $region5: #{tpu_custom_call.1} parent=1 // loop_body
      %s26 = ssub.s32 %s21, 1
      %s27 = ssub.s32 %s21, 2
      %s28 = sadd.s32 %s21, 1
      %s29 = ssub.s32 %s21, %s28
      %p30 = scmp.eq.s32.totalorder %s29, 0
      %s32 = sadd.s32 %s31, 1
      %s33 = scalar_select %p30, %s31, %s32
      %p36 = pneg %p30
      %p37 = scmp.eq.s32.totalorder %s21, 1
      %p38 = por %p36, %p37
      %p39 = scmp.ne.s32.totalorder %s31, %s34
      %p40 = scmp.eq.s32.totalorder %s21, 0
      %p41 = por %p39, %p40
      %p42 = scmp.ne.s32.totalorder %s31, %s34
      %p43 = scmp.eq.s32.totalorder %s26, 1
      %p44 = por %p42, %p43
      %p45 = scmp.ne.s32.totalorder %s34, %s35
      %p46 = scmp.eq.s32.totalorder %s26, 0
      %p47 = por %p45, %p46
      %p48 = scmp.ne.s32.totalorder %s34, %s35
      %p49 = scmp.eq.s32.totalorder %s27, 1
      %p50 = por %p48, %p49
      %p52 = scmp.ne.s32.totalorder %s35, %s51
      %p53 = scmp.eq.s32.totalorder %s27, 0
      %p54 = por %p52, %p53
      %s56 = sadd.s32 %s55, 1
      %p59 = scmp.eq.s32.totalorder %s21, 1
      %p60 = scmp.ne.s32.totalorder %s55, %s57
      %p61 = scmp.eq.s32.totalorder %s21, 0
      %p62 = por %p60, %p61
      %p63 = scmp.ne.s32.totalorder %s55, %s57
      %p64 = scmp.eq.s32.totalorder %s26, 1
      %p65 = por %p63, %p64
      %p66 = scmp.ne.s32.totalorder %s57, %s58
      %p67 = scmp.eq.s32.totalorder %s26, 0
      %p68 = por %p66, %p67
      %p69 = scmp.ne.s32.totalorder %s57, %s58
      %p70 = scmp.eq.s32.totalorder %s27, 1
      %p71 = por %p69, %p70
      %p73 = scmp.ne.s32.totalorder %s58, %s72
      %p74 = scmp.eq.s32.totalorder %s27, 0
      %p75 = por %p73, %p74
      %s77 = sadd.s32 %s76, 1
      %p80 = scmp.eq.s32.totalorder %s21, 1
      %p81 = scmp.ne.s32.totalorder %s76, %s78
      %p82 = scmp.eq.s32.totalorder %s21, 0
      %p83 = por %p81, %p82
      %p84 = scmp.ne.s32.totalorder %s76, %s78
      %p85 = scmp.eq.s32.totalorder %s26, 1
      %p86 = por %p84, %p85
      %p87 = scmp.ne.s32.totalorder %s78, %s79
      %p88 = scmp.eq.s32.totalorder %s26, 0
      %p89 = por %p87, %p88
      %p90 = scmp.ne.s32.totalorder %s78, %s79
      %p91 = scmp.eq.s32.totalorder %s27, 1
      %p92 = por %p90, %p91
      %p94 = scmp.ne.s32.totalorder %s79, %s93
      %p95 = scmp.eq.s32.totalorder %s27, 0
      %p96 = por %p94, %p95
      %s98 = sadd.s32 %s97, 1
      %p101 = scmp.eq.s32.totalorder %s21, 1
      %p102 = scmp.ne.s32.totalorder %s97, %s99
      %p103 = scmp.eq.s32.totalorder %s21, 0
      %p104 = por %p102, %p103
      %p105 = scmp.ne.s32.totalorder %s97, %s99
      %p106 = scmp.eq.s32.totalorder %s26, 1
      %p107 = por %p105, %p106
      %p108 = scmp.ne.s32.totalorder %s99, %s100
      %p109 = scmp.eq.s32.totalorder %s26, 0
      %p110 = por %p108, %p109
      %p111 = scmp.ne.s32.totalorder %s99, %s100
      %p112 = scmp.eq.s32.totalorder %s27, 1
      %p113 = por %p111, %p112
      %p115 = scmp.ne.s32.totalorder %s100, %s114
      %p116 = scmp.eq.s32.totalorder %s27, 0
      %p117 = por %p115, %p116
      %s119 = sadd.s32 %s118, 1
      %p122 = scmp.eq.s32.totalorder %s21, 1
      %p123 = scmp.ne.s32.totalorder %s118, %s120
      %p124 = scmp.eq.s32.totalorder %s21, 0
      %p125 = por %p123, %p124
      %p126 = scmp.ne.s32.totalorder %s118, %s120
      %p127 = scmp.eq.s32.totalorder %s26, 1
      %p128 = por %p126, %p127
      %p129 = scmp.ne.s32.totalorder %s120, %s121
      %p130 = scmp.eq.s32.totalorder %s26, 0
      %p131 = por %p129, %p130
      %p132 = scmp.ne.s32.totalorder %s120, %s121
      %p133 = scmp.eq.s32.totalorder %s27, 1
      %p134 = por %p132, %p133
      %p136 = scmp.ne.s32.totalorder %s121, %s135
      %p137 = scmp.eq.s32.totalorder %s27, 0
      %p138 = por %p136, %p137
      %s140 = sadd.s32 %s139, 1
      %p143 = scmp.eq.s32.totalorder %s21, 1
      %p144 = scmp.ne.s32.totalorder %s139, %s141
      %p145 = scmp.eq.s32.totalorder %s21, 0
      %p146 = por %p144, %p145
      %p147 = scmp.ne.s32.totalorder %s139, %s141
      %p148 = scmp.eq.s32.totalorder %s26, 1
      %p149 = por %p147, %p148
      %p150 = scmp.ne.s32.totalorder %s141, %s142
      %p151 = scmp.eq.s32.totalorder %s26, 0
      %p152 = por %p150, %p151
      %p153 = scmp.ne.s32.totalorder %s141, %s142
      %p154 = scmp.eq.s32.totalorder %s27, 1
      %p155 = por %p153, %p154
      %p157 = scmp.ne.s32.totalorder %s142, %s156
      %p158 = scmp.eq.s32.totalorder %s27, 0
      %p159 = por %p157, %p158
      %s161 = sadd.s32 %s160, 1
      %p164 = scmp.eq.s32.totalorder %s21, 1
      %p165 = scmp.ne.s32.totalorder %s160, %s162
      %p166 = scmp.eq.s32.totalorder %s21, 0
      %p167 = por %p165, %p166
      %p168 = scmp.ne.s32.totalorder %s160, %s162
      %p169 = scmp.eq.s32.totalorder %s26, 1
      %p170 = por %p168, %p169
      %p171 = scmp.ne.s32.totalorder %s162, %s163
      %p172 = scmp.eq.s32.totalorder %s26, 0
      %p173 = por %p171, %p172
      %p174 = scmp.ne.s32.totalorder %s162, %s163
      %p175 = scmp.eq.s32.totalorder %s27, 1
      %p176 = por %p174, %p175
      %p178 = scmp.ne.s32.totalorder %s163, %s177
      %p179 = scmp.eq.s32.totalorder %s27, 0
      %p180 = por %p178, %p179
      %s182 = sadd.s32 %s181, 1
      %p185 = scmp.eq.s32.totalorder %s21, 1
      %p186 = scmp.ne.s32.totalorder %s181, %s183
      %p187 = scmp.eq.s32.totalorder %s21, 0
      %p188 = por %p186, %p187
      %p189 = scmp.ne.s32.totalorder %s181, %s183
      %p190 = scmp.eq.s32.totalorder %s26, 1
      %p191 = por %p189, %p190
      %p192 = scmp.ne.s32.totalorder %s183, %s184
      %p193 = scmp.eq.s32.totalorder %s26, 0
      %p194 = por %p192, %p193
      %p195 = scmp.ne.s32.totalorder %s183, %s184
      %p196 = scmp.eq.s32.totalorder %s27, 1
      %p197 = por %p195, %p196
      %p199 = scmp.ne.s32.totalorder %s184, %s198
      %p200 = scmp.eq.s32.totalorder %s27, 0
      %p201 = por %p199, %p200
      %s203 = sadd.s32 %s202, 1
      %p206 = scmp.eq.s32.totalorder %s21, 1
      %p207 = scmp.ne.s32.totalorder %s202, %s204
      %p208 = scmp.eq.s32.totalorder %s21, 0
      %p209 = por %p207, %p208
      %p210 = scmp.ne.s32.totalorder %s202, %s204
      %p211 = scmp.eq.s32.totalorder %s26, 1
      %p212 = por %p210, %p211
      %p213 = scmp.ne.s32.totalorder %s204, %s205
      %p214 = scmp.eq.s32.totalorder %s26, 0
      %p215 = por %p213, %p214
      %p216 = scmp.ne.s32.totalorder %s204, %s205
      %p217 = scmp.eq.s32.totalorder %s27, 1
      %p218 = por %p216, %p217
      %p220 = scmp.ne.s32.totalorder %s205, %s219
      %p221 = scmp.eq.s32.totalorder %s27, 0
      %p222 = por %p220, %p221
      %s224 = sadd.s32 %s223, 1
      %p227 = scmp.eq.s32.totalorder %s21, 1
      %p228 = scmp.ne.s32.totalorder %s223, %s225
      %p229 = scmp.eq.s32.totalorder %s21, 0
      %p230 = por %p228, %p229
      %p231 = scmp.ne.s32.totalorder %s223, %s225
      %p232 = scmp.eq.s32.totalorder %s26, 1
      %p233 = por %p231, %p232
      %p234 = scmp.ne.s32.totalorder %s225, %s226
      %p235 = scmp.eq.s32.totalorder %s26, 0
      %p236 = por %p234, %p235
      %p237 = scmp.ne.s32.totalorder %s225, %s226
      %p238 = scmp.eq.s32.totalorder %s27, 1
      %p239 = por %p237, %p238
      %p241 = scmp.ne.s32.totalorder %s226, %s240
      %p242 = scmp.eq.s32.totalorder %s27, 0
      %p243 = por %p241, %p242
      %s245 = sadd.s32 %s244, 1
      %p248 = scmp.eq.s32.totalorder %s21, 1
      %p249 = scmp.ne.s32.totalorder %s244, %s246
      %p250 = scmp.eq.s32.totalorder %s21, 0
      %p251 = por %p249, %p250
      %p252 = scmp.ne.s32.totalorder %s244, %s246
      %p253 = scmp.eq.s32.totalorder %s26, 1
      %p254 = por %p252, %p253
      %p255 = scmp.ne.s32.totalorder %s246, %s247
      %p256 = scmp.eq.s32.totalorder %s26, 0
      %p257 = por %p255, %p256
      %p258 = scmp.ne.s32.totalorder %s246, %s247
      %p259 = scmp.eq.s32.totalorder %s27, 1
      %p260 = por %p258, %p259
      %p262 = scmp.ne.s32.totalorder %s247, %s261
      %p263 = scmp.eq.s32.totalorder %s27, 0
      %p264 = por %p262, %p263
      %s266 = sadd.s32 %s265, 1
      %p269 = scmp.eq.s32.totalorder %s21, 1
      %p270 = scmp.ne.s32.totalorder %s265, %s267
      %p271 = scmp.eq.s32.totalorder %s21, 0
      %p272 = por %p270, %p271
      %p273 = scmp.ne.s32.totalorder %s265, %s267
      %p274 = scmp.eq.s32.totalorder %s26, 1
      %p275 = por %p273, %p274
      %p276 = scmp.ne.s32.totalorder %s267, %s268
      %p277 = scmp.eq.s32.totalorder %s26, 0
      %p278 = por %p276, %p277
      %p279 = scmp.ne.s32.totalorder %s267, %s268
      %p280 = scmp.eq.s32.totalorder %s27, 1
      %p281 = por %p279, %p280
      %p283 = scmp.ne.s32.totalorder %s268, %s282
      %p284 = scmp.eq.s32.totalorder %s27, 0
      %p285 = por %p283, %p284
      %s286 = ssub.s32 %s21, %s28
      %p287 = scmp.eq.s32.totalorder %s286, 0
      %s289 = sadd.s32 %s288, 1
      %s290 = scalar_select %p287, %s288, %s289
      %p293 = pneg %p287
      %p294 = scmp.eq.s32.totalorder %s21, 1
      %p295 = por %p293, %p294
      %p296 = scmp.ne.s32.totalorder %s288, %s291
      %p297 = scmp.eq.s32.totalorder %s21, 0
      %p298 = por %p296, %p297
      %p299 = scmp.ne.s32.totalorder %s288, %s291
      %p300 = scmp.eq.s32.totalorder %s26, 1
      %p301 = por %p299, %p300
      %p302 = scmp.ne.s32.totalorder %s291, %s292
      %p303 = scmp.eq.s32.totalorder %s26, 0
      %p304 = por %p302, %p303
      %p305 = scmp.ne.s32.totalorder %s291, %s292
      %p306 = scmp.eq.s32.totalorder %s27, 1
      %p307 = por %p305, %p306
      %p309 = scmp.ne.s32.totalorder %s292, %s308
      %p310 = scmp.eq.s32.totalorder %s27, 0
      %p311 = por %p309, %p310
      %p312 = scmp.le.s32.totalorder 1, %s21
      %p313 = scmp.lt.s32.totalorder %s21, 3
      %p314 = pnand %p312, %p313
      %p315 = pneg %p314
      // Predicated region
      $region9: #{tpu_custom_call.1} parent=5 // pred_check
        _
      $region10: #{tpu_custom_call.1} parent=5 // pred_check_branch
        %317 = sbr.rel (%p314) target = $region12
      $region11: #{tpu_custom_call.1} parent=5 // pred_region
        %s318 = ssub.s32 %s21, 1
        // Predicated region
        $region13: #{tpu_custom_call.1} parent=11 // pred_check
          %p319 = pneg %p68
        $region14: #{tpu_custom_call.1} parent=11 // pred_check_branch
          %321 = sbr.rel (%p319) target = $region16
        $region15: #{tpu_custom_call.1} parent=11 // pred_region
          _
        $region16: #{tpu_custom_call.1} parent=11 // pred_fallthru
          _
        // Predicated region
        $region17: #{tpu_custom_call.1} parent=11 // pred_check
          %p322 = pneg %p89
        $region18: #{tpu_custom_call.1} parent=11 // pred_check_branch
          %324 = sbr.rel (%p322) target = $region20
        $region19: #{tpu_custom_call.1} parent=11 // pred_region
          _
        $region20: #{tpu_custom_call.1} parent=11 // pred_fallthru
          _
        // Predicated region
        $region21: #{tpu_custom_call.1} parent=11 // pred_check
          %p325 = pneg %p110
        $region22: #{tpu_custom_call.1} parent=11 // pred_check_branch
          %327 = sbr.rel (%p325) target = $region24
        $region23: #{tpu_custom_call.1} parent=11 // pred_region
          _
        $region24: #{tpu_custom_call.1} parent=11 // pred_fallthru
          _
        // Predicated region
        $region25: #{tpu_custom_call.1} parent=11 // pred_check
          %p328 = pneg %p131
        $region26: #{tpu_custom_call.1} parent=11 // pred_check_branch
          %330 = sbr.rel (%p328) target = $region28
        $region27: #{tpu_custom_call.1} parent=11 // pred_region
          _
        $region28: #{tpu_custom_call.1} parent=11 // pred_fallthru
          _
        // Predicated region
        $region29: #{tpu_custom_call.1} parent=11 // pred_check
          %p331 = pneg %p152
        $region30: #{tpu_custom_call.1} parent=11 // pred_check_branch
          %333 = sbr.rel (%p331) target = $region32
        $region31: #{tpu_custom_call.1} parent=11 // pred_region
          _
        $region32: #{tpu_custom_call.1} parent=11 // pred_fallthru
          _
        // Predicated region
        $region33: #{tpu_custom_call.1} parent=11 // pred_check
          %p334 = pneg %p173
        $region34: #{tpu_custom_call.1} parent=11 // pred_check_branch
          %336 = sbr.rel (%p334) target = $region36
        $region35: #{tpu_custom_call.1} parent=11 // pred_region
          _
        $region36: #{tpu_custom_call.1} parent=11 // pred_fallthru
          _
        // Predicated region
        $region37: #{tpu_custom_call.1} parent=11 // pred_check
          %p337 = pneg %p194
        $region38: #{tpu_custom_call.1} parent=11 // pred_check_branch
          %339 = sbr.rel (%p337) target = $region40
        $region39: #{tpu_custom_call.1} parent=11 // pred_region
          _
        $region40: #{tpu_custom_call.1} parent=11 // pred_fallthru
          _
        // Predicated region
        $region41: #{tpu_custom_call.1} parent=11 // pred_check
          %p340 = pneg %p215
        $region42: #{tpu_custom_call.1} parent=11 // pred_check_branch
          %342 = sbr.rel (%p340) target = $region44
        $region43: #{tpu_custom_call.1} parent=11 // pred_region
          _
        $region44: #{tpu_custom_call.1} parent=11 // pred_fallthru
          _
        // Predicated region
        $region45: #{tpu_custom_call.1} parent=11 // pred_check
          %p343 = pneg %p236
        $region46: #{tpu_custom_call.1} parent=11 // pred_check_branch
          %345 = sbr.rel (%p343) target = $region48
        $region47: #{tpu_custom_call.1} parent=11 // pred_region
          _
        $region48: #{tpu_custom_call.1} parent=11 // pred_fallthru
          _
        // Predicated region
        $region49: #{tpu_custom_call.1} parent=11 // pred_check
          %p346 = pneg %p257
        $region50: #{tpu_custom_call.1} parent=11 // pred_check_branch
          %348 = sbr.rel (%p346) target = $region52
        $region51: #{tpu_custom_call.1} parent=11 // pred_region
          _
        $region52: #{tpu_custom_call.1} parent=11 // pred_fallthru
          _
        // Predicated region
        $region53: #{tpu_custom_call.1} parent=11 // pred_check
          %p349 = pneg %p278
        $region54: #{tpu_custom_call.1} parent=11 // pred_check_branch
          %351 = sbr.rel (%p349) target = $region56
        $region55: #{tpu_custom_call.1} parent=11 // pred_region
          _
        $region56: #{tpu_custom_call.1} parent=11 // pred_fallthru
          _
      $region12: #{tpu_custom_call.1} parent=5 // pred_fallthru
        _
      %p352 = scmp.lt.s32.totalorder %s21, 2
      // Predicated region
      $region57: #{tpu_custom_call.1} parent=5 // pred_check
        %p353 = pneg %p352
      $region58: #{tpu_custom_call.1} parent=5 // pred_check_branch
        %355 = sbr.rel (%p353) target = $region60
      $region59: #{tpu_custom_call.1} parent=5 // pred_region
        // Predicated region
        $region61: #{tpu_custom_call.1} parent=59 // pred_check
          %p356 = pneg %p41
        $region62: #{tpu_custom_call.1} parent=59 // pred_check_branch
          %358 = sbr.rel (%p356) target = $region64
        $region63: #{tpu_custom_call.1} parent=59 // pred_region
          %p359 = scmp.lt.s32.totalorder %s21, 1
          %s360 = scalar_select %p359, %s21, 1
          %s361 = smul.addr %s360, 8
          %s362 = scalar_lea.vmem %s0, %s361
        $region64: #{tpu_custom_call.1} parent=59 // pred_fallthru
          _
      $region60: #{tpu_custom_call.1} parent=5 // pred_fallthru
        _
      %p363 = scmp.le.s32.totalorder 1, %s21
      %p364 = scmp.lt.s32.totalorder %s21, 3
      %p365 = pnand %p363, %p364
      %p366 = pneg %p365
      // Predicated region
      $region65: #{tpu_custom_call.1} parent=5 // pred_check
        _
      $region66: #{tpu_custom_call.1} parent=5 // pred_check_branch
        %368 = sbr.rel (%p365) target = $region68
      $region67: #{tpu_custom_call.1} parent=5 // pred_region
        %s369 = ssub.s32 %s21, 1
        %p370 = scmp.lt.s32.totalorder %s26, 1
        %s371 = scalar_select %p370, %s26, 1
        %s372 = smul.addr %s371, 8
        %s373 = scalar_lea.vmem %s0, %s372
        %p374 = pneg %p47
        %p375 = pneg %p44
        %p376 = pneg %p68
        %p377 = pneg %p65
        %p378 = pneg %p89
        %p379 = pneg %p86
        %p380 = pneg %p110
        %p381 = pneg %p107
        %p382 = pneg %p131
        %p383 = pneg %p128
        %p384 = pneg %p152
        %p385 = pneg %p149
        %p386 = pneg %p173
        %p387 = pneg %p170
        %p388 = pneg %p194
        %p389 = pneg %p191
        %p390 = pneg %p215
        %p391 = pneg %p212
        %p392 = pneg %p236
        %p393 = pneg %p233
        %p394 = pneg %p257
        %p395 = pneg %p254
        %p396 = pneg %p278
        %p397 = pneg %p275
        %p398 = pneg %p304
        %p399 = pneg %p301
        %s400 = sand.u32 %s291, 1
        %s401 = scalar_lea.sflag [#allocation3], %s400
        %s402 = sand.u32 %s291, 1
        %s403 = smul.addr %s402, 8
        %s404 = scalar_lea.vmem [#allocation2], %s403
        %p405 = scmp.lt.s32.totalorder %s26, 1
        %s406 = scalar_select %p405, %s26, 1
        %s407 = smul.addr %s406, 8
        %s408 = scalar_lea.vmem %s0, %s407
        %v410 = vld [vmem:[%s408] sm:$0xff]
        %v411 = vld [vmem:[%s1] sm:$0x1]
        %v412 = vld [vmem:[%s2] sm:$0x1]
        %vm413 = vcmask 523264
        %v414 = vsel %vm413, %v410, 0.0
        %415 = vadd.xlane.f32.xlu0 %v414
        %v416 = vpop.xlane.xlu0 %415
        %v417 = vrcp.pop 64.0
        %v418 = vmul.f32 64.0, %v417
        %v419 = vsub.f32 1.0, %v418
        %v420 = vmul.f32 %v417, %v419
        %v421 = vadd.f32 %v417, %v420
        %vm422 = vweird.f32 %v417
        %v423 = vsel %vm422, %v417, %v421
        %v424 = vmul.f32 %v416, %v423
        %v425 = vsub.f32 %v410, %v424
        %v426 = vmul.f32 %v425, %v425
        %v427 = vsel %vm413, %v426, 0.0
        %428 = vadd.xlane.f32.xlu0 %v427
        %v429 = vpop.xlane.xlu0 %428
        %v430 = vmul.f32 %v429, %v423
        %v431 = vadd.f32 %v430, 1e-05
        %v432 = vrsqrt.pop %v431
        %v433 = vmul.f32 %v432, %v431
        %v434 = vmul.f32 %v433, %v432
        %v435 = vmul.f32 0.5, %v434
        %v436 = vsub.f32 1.5, %v435
        %v437 = vmul.f32 %v432, %v436
        %vm438 = vweird.f32 %v431
        %vm439 = vweird.f32 %v432
        %vm440 = vmor %vm438, %vm439
        %v441 = vsel %vm440, %v432, %v437
        %v442 = vmul.f32 %v425, %v441
        %v444 = vperm.slane %v411, 0
        %v446 = vmul.f32 %v442, %v444
        %v448 = vperm.slane %v412, 0
        %v450 = vadd.f32 %v446, %v448
        %v451 = vpack.c.bf16 %v450, %v450
        %v452 = vld [vmem:[%s3] sm:$0xff]
        %v453 = vld [vmem:[%s3 + $0x8] sm:$0xff]
        %v454 = vld [vmem:[%s3 + $0x10] sm:$0xff]
        %v455 = vld [vmem:[%s3 + $0x18] sm:$0xff]
        %v456 = vld [vmem:[%s3 + $0x20] sm:$0xff]
        %v457 = vld [vmem:[%s3 + $0x28] sm:$0xff]
        %v458 = vld [vmem:[%s3 + $0x30] sm:$0xff]
        %v459 = vld [vmem:[%s3 + $0x38] sm:$0xff]
        %v468 = vunpack.c.l.b16 %v452
        %v469 = vunpack.c.h.b16 %v452
        %v470 = vunpack.c.l.b16 %v453
        %v471 = vunpack.c.h.b16 %v453
        %v472 = vunpack.c.l.b16 %v454
        %v473 = vunpack.c.h.b16 %v454
        %v474 = vunpack.c.l.b16 %v455
        %v475 = vunpack.c.h.b16 %v455
        %v476 = vunpack.c.l.b16 %v456
        %v477 = vunpack.c.h.b16 %v456
        %v478 = vunpack.c.l.b16 %v457
        %v479 = vunpack.c.h.b16 %v457
        %v480 = vunpack.c.l.b16 %v458
        %v481 = vunpack.c.h.b16 %v458
        %v482 = vunpack.c.l.b16 %v459
        %v483 = vunpack.c.h.b16 %v459
        %v484 = vpack.c.b16 %v470, %v468
        %v485 = vpack.c.b16 %v471, %v469
        %v486 = vpack.c.b16 %v474, %v472
        %v487 = vpack.c.b16 %v475, %v473
        %v488 = vpack.c.b16 %v478, %v476
        %v489 = vpack.c.b16 %v479, %v477
        %v490 = vpack.c.b16 %v482, %v480
        %v491 = vpack.c.b16 %v483, %v481
        %v501 = vsel %vm413, %v451, 0
        %503 = vmatpush.bf16.msra.mxu0 0
        %504 = vmatpush.bf16.msra.mxu0 0
        %505 = vmatpush.bf16.msra.mxu0 0
        %506 = vmatpush.bf16.msra.mxu0 0
        %507 = vmatpush.bf16.msra.mxu0 %v490
        %508 = vmatpush.bf16.msra.mxu0 %v488
        %509 = vmatpush.bf16.msra.mxu0 %v486
        %510 = vmatpush.bf16.msra.mxu0 %v484
        %511 = vmatmul.bf16.gmra.mxu0 %v501
        %v512 = vpop.f32.mrf.mxu0
        %v513 = vadd.f32 0.0, %v512
        %v514 = vpop.f32.mrf.mxu0
        %515 = vdwg.mxu0
        %516 = vmatpush.bf16.msra.mxu0 0
        %517 = vmatpush.bf16.msra.mxu0 0
        %518 = vmatpush.bf16.msra.mxu0 0
        %519 = vmatpush.bf16.msra.mxu0 0
        %520 = vmatpush.bf16.msra.mxu0 %v491
        %521 = vmatpush.bf16.msra.mxu0 %v489
        %522 = vmatpush.bf16.msra.mxu0 %v487
        %523 = vmatpush.bf16.msra.mxu0 %v485
        %524 = vmatmul.bf16.gmra.mxu0 %v501
        %v525 = vpop.f32.mrf.mxu0
        %v526 = vadd.f32 0.0, %v525
        %v527 = vpop.f32.mrf.mxu0
        %528 = vdwg.mxu0
        %v529 = vmul.f32 %v513, 0.25
        %531 = vrot.lane.b32.xlu0 %v529, 112
        %v532 = vpop.permute.xlu0 %531
        %534 = vrot.lane.b32.xlu0 %v529, 96
        %v535 = vpop.permute.xlu0 %534
        %537 = vrot.lane.b32.xlu0 %v529, 80
        %v538 = vpop.permute.xlu0 %537
        %v540 = vpack.c.bf16 %v529, %v529
        %v541 = vpack.c.bf16 %v532, %v532
        %v542 = vpack.c.bf16 %v535, %v535
        %v543 = vpack.c.bf16 %v538, %v538
        %545 = vrot.lane.b32.xlu0 %v513, 112
        %v546 = vpop.permute.xlu0 %545
        %548 = vrot.lane.b32.xlu0 %v513, 96
        %v549 = vpop.permute.xlu0 %548
        %551 = vrot.lane.b32.xlu0 %v513, 80
        %v552 = vpop.permute.xlu0 %551
        %v554 = vpack.c.bf16 %v513, %v513
        %v555 = vpack.c.bf16 %v546, %v546
        %v556 = vpack.c.bf16 %v549, %v549
        %v557 = vpack.c.bf16 %v552, %v552
        %559 = vrot.lane.b32.xlu0 %v526, 112
        %v560 = vpop.permute.xlu0 %559
        %562 = vrot.lane.b32.xlu0 %v526, 96
        %v563 = vpop.permute.xlu0 %562
        %565 = vrot.lane.b32.xlu0 %v526, 80
        %v566 = vpop.permute.xlu0 %565
        %v568 = vpack.c.bf16 %v526, %v526
        %v569 = vpack.c.bf16 %v560, %v560
        %v570 = vpack.c.bf16 %v563, %v563
        %v571 = vpack.c.bf16 %v566, %v566
        %v573 = vunpack.c.l.b16 %v554
        %v574 = vpack.c.b16 %v573, %v573
        %575 = vrot.lane.b32.xlu0 %v574, 64
        %v576 = vpop.permute.xlu0 %575
        %vm577 = vcmask 130048
        %v579 = vsel %vm577, %v540, 0
        %v582 = vsel %vm577, %v576, 0
        %584 = vmatpush.bf16.xpose.msra.mxu0 0
        %585 = vmatpush.bf16.xpose.msra.mxu0 0
        %586 = vmatpush.bf16.xpose.msra.mxu0 0
        %587 = vmatpush.bf16.xpose.msra.mxu0 0
        %588 = vmatpush.bf16.xpose.msra.mxu0 0
        %589 = vmatpush.bf16.xpose.msra.mxu0 0
        %590 = vmatpush.bf16.xpose.msra.mxu0 0
        %591 = vmatpush.bf16.xpose.msra.mxu0 %v582
        %592 = vmatmul.bf16.gmra.mxu0 %v579
        %v593 = vpop.f32.mrf.mxu0
        %v594 = vadd.f32 0.0, %v593
        %v595 = vpop.f32.mrf.mxu0
        %596 = vdwg.mxu0
        %v598 = vunpack.c.l.b16 %v555
        %v599 = vpack.c.b16 %v598, %v598
        %600 = vrot.lane.b32.xlu0 %v599, 64
        %v601 = vpop.permute.xlu0 %600
        %v603 = vsel %vm577, %v541, 0
        %v606 = vsel %vm577, %v601, 0
        %608 = vmatpush.bf16.xpose.msra.mxu0 0
        %609 = vmatpush.bf16.xpose.msra.mxu0 0
        %610 = vmatpush.bf16.xpose.msra.mxu0 0
        %611 = vmatpush.bf16.xpose.msra.mxu0 0
        %612 = vmatpush.bf16.xpose.msra.mxu0 0
        %613 = vmatpush.bf16.xpose.msra.mxu0 0
        %614 = vmatpush.bf16.xpose.msra.mxu0 0
        %615 = vmatpush.bf16.xpose.msra.mxu0 %v606
        %616 = vmatmul.bf16.gmra.mxu0 %v603
        %v617 = vpop.f32.mrf.mxu0
        %v618 = vadd.f32 0.0, %v617
        %v619 = vpop.f32.mrf.mxu0
        %620 = vdwg.mxu0
        %v622 = vunpack.c.l.b16 %v556
        %v623 = vpack.c.b16 %v622, %v622
        %624 = vrot.lane.b32.xlu0 %v623, 64
        %v625 = vpop.permute.xlu0 %624
        %v627 = vsel %vm577, %v542, 0
        %v630 = vsel %vm577, %v625, 0
        %632 = vmatpush.bf16.xpose.msra.mxu0 0
        %633 = vmatpush.bf16.xpose.msra.mxu0 0
        %634 = vmatpush.bf16.xpose.msra.mxu0 0
        %635 = vmatpush.bf16.xpose.msra.mxu0 0
        %636 = vmatpush.bf16.xpose.msra.mxu0 0
        %637 = vmatpush.bf16.xpose.msra.mxu0 0
        %638 = vmatpush.bf16.xpose.msra.mxu0 0
        %639 = vmatpush.bf16.xpose.msra.mxu0 %v630
        %640 = vmatmul.bf16.gmra.mxu0 %v627
        %v641 = vpop.f32.mrf.mxu0
        %v642 = vadd.f32 0.0, %v641
        %v643 = vpop.f32.mrf.mxu0
        %644 = vdwg.mxu0
        %v646 = vunpack.c.l.b16 %v557
        %v647 = vpack.c.b16 %v646, %v646
        %648 = vrot.lane.b32.xlu0 %v647, 64
        %v649 = vpop.permute.xlu0 %648
        %v651 = vsel %vm577, %v543, 0
        %v654 = vsel %vm577, %v649, 0
        %656 = vmatpush.bf16.xpose.msra.mxu0 0
        %657 = vmatpush.bf16.xpose.msra.mxu0 0
        %658 = vmatpush.bf16.xpose.msra.mxu0 0
        %659 = vmatpush.bf16.xpose.msra.mxu0 0
        %660 = vmatpush.bf16.xpose.msra.mxu0 0
        %661 = vmatpush.bf16.xpose.msra.mxu0 0
        %662 = vmatpush.bf16.xpose.msra.mxu0 0
        %663 = vmatpush.bf16.xpose.msra.mxu0 %v654
        %664 = vmatmul.bf16.gmra.mxu0 %v651
        %v665 = vpop.f32.mrf.mxu0
        %v666 = vadd.f32 0.0, %v665
        %v667 = vpop.f32.mrf.mxu0
        %668 = vdwg.mxu0
        %v669 = vlaneseq
        %v670 = vshrl.u32 %v669, 7
        %v671 = vlaneseq
        %v672 = vand.u32 %v671, 127
        %vm673 = vcmp.le.s32.totalorder %v672, %v670
        %v674 = vsel %vm673, 1, 0
        %vm675 = vcmp.eq.s32.totalorder %v674, 1
        %v676 = vsel %vm675, %v594, -1e+30
        %v677 = vsel %vm675, %v618, -1e+30
        %v678 = vsel %vm675, %v642, -1e+30
        %v679 = vsel %vm675, %v666, -1e+30
        %vm680 = vcmask 64512
        %v681 = vsel %vm680, %v676, -inf
        %682 = vmax.xlane.f32.xlu0 %v681
        %v683 = vpop.xlane.xlu0 %682
        %v684 = vsel %vm680, %v677, -inf
        %685 = vmax.xlane.f32.xlu0 %v684
        %v686 = vpop.xlane.xlu0 %685
        %v687 = vsel %vm680, %v678, -inf
        %688 = vmax.xlane.f32.xlu0 %v687
        %v689 = vpop.xlane.xlu0 %688
        %v690 = vsel %vm680, %v679, -inf
        %691 = vmax.xlane.f32.xlu0 %v690
        %v692 = vpop.xlane.xlu0 %691
        %v693 = vsub.f32 %v676, %v683
        %v694 = vsub.f32 %v677, %v686
        %v695 = vsub.f32 %v678, %v689
        %v696 = vsub.f32 %v679, %v692
        %v697 = vmul.f32 %v693, 1.442695
        %v698 = vpow.pop %v697
        %v699 = vmul.f32 %v694, 1.442695
        %v700 = vpow.pop %v699
        %v701 = vmul.f32 %v695, 1.442695
        %v702 = vpow.pop %v701
        %v703 = vmul.f32 %v696, 1.442695
        %v704 = vpow.pop %v703
        %v705 = vsel %vm680, %v698, 0.0
        %706 = vadd.xlane.f32.xlu0 %v705
        %v707 = vpop.xlane.xlu0 %706
        %v708 = vsel %vm680, %v700, 0.0
        %709 = vadd.xlane.f32.xlu0 %v708
        %v710 = vpop.xlane.xlu0 %709
        %v711 = vsel %vm680, %v702, 0.0
        %712 = vadd.xlane.f32.xlu0 %v711
        %v713 = vpop.xlane.xlu0 %712
        %v714 = vsel %vm680, %v704, 0.0
        %715 = vadd.xlane.f32.xlu0 %v714
        %v716 = vpop.xlane.xlu0 %715
        %v717 = vrcp.pop %v707
        %v718 = vrcp.pop %v710
        %v719 = vrcp.pop %v713
        %v720 = vrcp.pop %v716
        %v721 = vmul.f32 %v698, %v717
        %v722 = vmul.f32 %v700, %v718
        %v723 = vmul.f32 %v702, %v719
        %v724 = vmul.f32 %v704, %v720
        %v725 = vpack.c.bf16 %v721, %v721
        %v726 = vpack.c.bf16 %v722, %v722
        %v727 = vpack.c.bf16 %v723, %v723
        %v728 = vpack.c.bf16 %v724, %v724
        %v730 = vsel %vm680, %v725, 0
        %vm732 = vcmask 1043456
        %v734 = vsel %vm732, %v568, 0
        %736 = vmatpush.bf16.msra.mxu0 0
        %737 = vmatpush.bf16.msra.mxu0 0
        %738 = vmatpush.bf16.msra.mxu0 0
        %739 = vmatpush.bf16.msra.mxu0 0
        %740 = vmatpush.bf16.msra.mxu0 0
        %741 = vmatpush.bf16.msra.mxu0 0
        %742 = vmatpush.bf16.msra.mxu0 0
        %743 = vmatpush.bf16.msra.mxu0 %v734
        %744 = vmatmul.bf16.gmra.mxu0 %v730
        %v745 = vpop.f32.mrf.mxu0
        %v746 = vadd.f32 0.0, %v745
        %v747 = vpop.f32.mrf.mxu0
        %748 = vdwg.mxu0
        %v750 = vsel %vm680, %v726, 0
        %v753 = vsel %vm732, %v569, 0
        %755 = vmatpush.bf16.msra.mxu0 0
        %756 = vmatpush.bf16.msra.mxu0 0
        %757 = vmatpush.bf16.msra.mxu0 0
        %758 = vmatpush.bf16.msra.mxu0 0
        %759 = vmatpush.bf16.msra.mxu0 0
        %760 = vmatpush.bf16.msra.mxu0 0
        %761 = vmatpush.bf16.msra.mxu0 0
        %762 = vmatpush.bf16.msra.mxu0 %v753
        %763 = vmatmul.bf16.gmra.mxu0 %v750
        %v764 = vpop.f32.mrf.mxu0
        %v765 = vadd.f32 0.0, %v764
        %v766 = vpop.f32.mrf.mxu0
        %767 = vdwg.mxu0
        %v769 = vsel %vm680, %v727, 0
        %v772 = vsel %vm732, %v570, 0
        %774 = vmatpush.bf16.msra.mxu0 0
        %775 = vmatpush.bf16.msra.mxu0 0
        %776 = vmatpush.bf16.msra.mxu0 0
        %777 = vmatpush.bf16.msra.mxu0 0
        %778 = vmatpush.bf16.msra.mxu0 0
        %779 = vmatpush.bf16.msra.mxu0 0
        %780 = vmatpush.bf16.msra.mxu0 0
        %781 = vmatpush.bf16.msra.mxu0 %v772
        %782 = vmatmul.bf16.gmra.mxu0 %v769
        %v783 = vpop.f32.mrf.mxu0
        %v784 = vadd.f32 0.0, %v783
        %v785 = vpop.f32.mrf.mxu0
        %786 = vdwg.mxu0
        %v788 = vsel %vm680, %v728, 0
        %v791 = vsel %vm732, %v571, 0
        %793 = vmatpush.bf16.msra.mxu0 0
        %794 = vmatpush.bf16.msra.mxu0 0
        %795 = vmatpush.bf16.msra.mxu0 0
        %796 = vmatpush.bf16.msra.mxu0 0
        %797 = vmatpush.bf16.msra.mxu0 0
        %798 = vmatpush.bf16.msra.mxu0 0
        %799 = vmatpush.bf16.msra.mxu0 0
        %800 = vmatpush.bf16.msra.mxu0 %v791
        %801 = vmatmul.bf16.gmra.mxu0 %v788
        %v802 = vpop.f32.mrf.mxu0
        %v803 = vadd.f32 0.0, %v802
        %v804 = vpop.f32.mrf.mxu0
        %805 = vdwg.mxu0
        %807 = vrot.lane.b32.xlu0 %v765, 16
        %v808 = vpop.permute.xlu0 %807
        %811 = vrot.lane.b32.xlu0 %v784, 32
        %v812 = vpop.permute.xlu0 %811
        %815 = vrot.lane.b32.xlu0 %v803, 48
        %v816 = vpop.permute.xlu0 %815
        %v818 = vsel %vm577, %v746, %v808
        %vm819 = vcmask 261120
        %v820 = vsel %vm819, %v818, %v812
        %vm821 = vcmask 392192
        %v822 = vsel %vm821, %v820, %v816
        %v823 = vpack.c.bf16 %v822, %v822
        %v824 = vld [vmem:[%s4] sm:$0xf]
        %v825 = vld [vmem:[%s4 + $0x4] sm:$0xf]
        %v826 = vld [vmem:[%s4 + $0x8] sm:$0xf]
        %v827 = vld [vmem:[%s4 + $0xc] sm:$0xf]
        %v828 = vld [vmem:[%s4 + $0x10] sm:$0xf]
        %v829 = vld [vmem:[%s4 + $0x14] sm:$0xf]
        %v830 = vld [vmem:[%s4 + $0x18] sm:$0xf]
        %v831 = vld [vmem:[%s4 + $0x1c] sm:$0xf]
        %v832 = vld [vmem:[%s5] sm:$0x1]
        %v834 = vperm.slane %v832, 0
        %v844 = vunpack.c.l.b16 %v824
        %v845 = vunpack.c.l.b16 %v825
        %v846 = vunpack.c.l.b16 %v826
        %v847 = vunpack.c.l.b16 %v827
        %v848 = vunpack.c.l.b16 %v828
        %v849 = vunpack.c.l.b16 %v829
        %v850 = vunpack.c.l.b16 %v830
        %v851 = vunpack.c.l.b16 %v831
        %v852 = vpack.c.b16 %v845, %v844
        %v853 = vpack.c.b16 %v847, %v846
        %v854 = vpack.c.b16 %v849, %v848
        %v855 = vpack.c.b16 %v851, %v850
        %v861 = vsel %vm413, %v823, 0
        %863 = vmatpush.bf16.msra.mxu0 0
        %864 = vmatpush.bf16.msra.mxu0 0
        %865 = vmatpush.bf16.msra.mxu0 0
        %866 = vmatpush.bf16.msra.mxu0 0
        %867 = vmatpush.bf16.msra.mxu0 %v855
        %868 = vmatpush.bf16.msra.mxu0 %v854
        %869 = vmatpush.bf16.msra.mxu0 %v853
        %870 = vmatpush.bf16.msra.mxu0 %v852
        %871 = vmatmul.bf16.gmra.mxu0 %v861
        %v872 = vpop.f32.mrf.mxu0
        %v873 = vadd.f32 %v834, %v872
        %v874 = vpop.f32.mrf.mxu0
        %875 = vdwg.mxu0
        %v876 = vadd.f32 %v410, %v873
        %v877 = vld [vmem:[%s6] sm:$0x1]
        %v878 = vld [vmem:[%s7] sm:$0x1]
        %v879 = vsel %vm413, %v876, 0.0
        %880 = vadd.xlane.f32.xlu0 %v879
        %v881 = vpop.xlane.xlu0 %880
        %v882 = vmul.f32 %v881, %v423
        %v883 = vsub.f32 %v876, %v882
        %v884 = vmul.f32 %v883, %v883
        %v885 = vsel %vm413, %v884, 0.0
        %886 = vadd.xlane.f32.xlu0 %v885
        %v887 = vpop.xlane.xlu0 %886
        %v888 = vmul.f32 %v887, %v423
        %v889 = vadd.f32 %v888, 1e-05
        %v890 = vrsqrt.pop %v889
        %v891 = vmul.f32 %v890, %v889
        %v892 = vmul.f32 %v891, %v890
        %v893 = vmul.f32 0.5, %v892
        %v894 = vsub.f32 1.5, %v893
        %v895 = vmul.f32 %v890, %v894
        %vm896 = vweird.f32 %v889
        %vm897 = vweird.f32 %v890
        %vm898 = vmor %vm896, %vm897
        %v899 = vsel %vm898, %v890, %v895
        %v900 = vmul.f32 %v883, %v899
        %v902 = vperm.slane %v877, 0
        %v904 = vmul.f32 %v900, %v902
        %v906 = vperm.slane %v878, 0
        %v908 = vadd.f32 %v904, %v906
        %v909 = vpack.c.bf16 %v908, %v908
        %v910 = vld [vmem:[%s8] sm:$0xff]
        %v911 = vld [vmem:[%s8 + $0x8] sm:$0xff]
        %v912 = vld [vmem:[%s8 + $0x10] sm:$0xff]
        %v913 = vld [vmem:[%s8 + $0x18] sm:$0xff]
        %v914 = vld [vmem:[%s8 + $0x20] sm:$0xff]
        %v915 = vld [vmem:[%s8 + $0x28] sm:$0xff]
        %v916 = vld [vmem:[%s8 + $0x30] sm:$0xff]
        %v917 = vld [vmem:[%s8 + $0x38] sm:$0xff]
        %v918 = vld [vmem:[%s9] sm:$0x3]
        %v920 = vperm.slane %v918, 0
        %v921 = vperm.slane %v918, 1
        %v932 = vunpack.c.l.b16 %v910
        %v933 = vunpack.c.h.b16 %v910
        %v934 = vunpack.c.l.b16 %v911
        %v935 = vunpack.c.h.b16 %v911
        %v936 = vunpack.c.l.b16 %v912
        %v937 = vunpack.c.h.b16 %v912
        %v938 = vunpack.c.l.b16 %v913
        %v939 = vunpack.c.h.b16 %v913
        %v940 = vunpack.c.l.b16 %v914
        %v941 = vunpack.c.h.b16 %v914
        %v942 = vunpack.c.l.b16 %v915
        %v943 = vunpack.c.h.b16 %v915
        %v944 = vunpack.c.l.b16 %v916
        %v945 = vunpack.c.h.b16 %v916
        %v946 = vunpack.c.l.b16 %v917
        %v947 = vunpack.c.h.b16 %v917
        %v948 = vpack.c.b16 %v934, %v932
        %v949 = vpack.c.b16 %v935, %v933
        %v950 = vpack.c.b16 %v938, %v936
        %v951 = vpack.c.b16 %v939, %v937
        %v952 = vpack.c.b16 %v942, %v940
        %v953 = vpack.c.b16 %v943, %v941
        %v954 = vpack.c.b16 %v946, %v944
        %v955 = vpack.c.b16 %v947, %v945
        %v965 = vsel %vm413, %v909, 0
        %967 = vmatpush.bf16.msra.mxu0 0
        %968 = vmatpush.bf16.msra.mxu0 0
        %969 = vmatpush.bf16.msra.mxu0 0
        %970 = vmatpush.bf16.msra.mxu0 0
        %971 = vmatpush.bf16.msra.mxu0 %v954
        %972 = vmatpush.bf16.msra.mxu0 %v952
        %973 = vmatpush.bf16.msra.mxu0 %v950
        %974 = vmatpush.bf16.msra.mxu0 %v948
        %975 = vmatmul.bf16.gmra.mxu0 %v965
        %v976 = vpop.f32.mrf.mxu0
        %v977 = vadd.f32 %v920, %v976
        %v978 = vpop.f32.mrf.mxu0
        %979 = vdwg.mxu0
        %980 = vmatpush.bf16.msra.mxu0 0
        %981 = vmatpush.bf16.msra.mxu0 0
        %982 = vmatpush.bf16.msra.mxu0 0
        %983 = vmatpush.bf16.msra.mxu0 0
        %984 = vmatpush.bf16.msra.mxu0 %v955
        %985 = vmatpush.bf16.msra.mxu0 %v953
        %986 = vmatpush.bf16.msra.mxu0 %v951
        %987 = vmatpush.bf16.msra.mxu0 %v949
        %988 = vmatmul.bf16.gmra.mxu0 %v965
        %v989 = vpop.f32.mrf.mxu0
        %v990 = vadd.f32 %v921, %v989
        %v991 = vpop.f32.mrf.mxu0
        %992 = vdwg.mxu0
        %v993 = vmax.f32 %v977, 0.0
        %v994 = vmax.f32 %v990, 0.0
        %v995 = vpack.c.bf16 %v993, %v993
        %v996 = vpack.c.bf16 %v994, %v994
        %v997 = vld [vmem:[%s10] sm:$0xf]
        %v998 = vld [vmem:[%s10 + $0x4] sm:$0xf]
        %v999 = vld [vmem:[%s10 + $0x8] sm:$0xf]
        %v1000 = vld [vmem:[%s10 + $0xc] sm:$0xf]
        %v1001 = vld [vmem:[%s10 + $0x10] sm:$0xf]
        %v1002 = vld [vmem:[%s10 + $0x14] sm:$0xf]
        %v1003 = vld [vmem:[%s10 + $0x18] sm:$0xf]
        %v1004 = vld [vmem:[%s10 + $0x1c] sm:$0xf]
        %v1005 = vld [vmem:[%s10 + $0x20] sm:$0xf]
        %v1006 = vld [vmem:[%s10 + $0x24] sm:$0xf]
        %v1007 = vld [vmem:[%s10 + $0x28] sm:$0xf]
        %v1008 = vld [vmem:[%s10 + $0x2c] sm:$0xf]
        %v1009 = vld [vmem:[%s10 + $0x30] sm:$0xf]
        %v1010 = vld [vmem:[%s10 + $0x34] sm:$0xf]
        %v1011 = vld [vmem:[%s10 + $0x38] sm:$0xf]
        %v1012 = vld [vmem:[%s10 + $0x3c] sm:$0xf]
        %v1013 = vld [vmem:[%s10 + $0x40] sm:$0xf]
        %v1014 = vld [vmem:[%s10 + $0x44] sm:$0xf]
        %v1015 = vld [vmem:[%s10 + $0x48] sm:$0xf]
        %v1016 = vld [vmem:[%s10 + $0x4c] sm:$0xf]
        %v1017 = vld [vmem:[%s10 + $0x50] sm:$0xf]
        %v1018 = vld [vmem:[%s10 + $0x54] sm:$0xf]
        %v1019 = vld [vmem:[%s10 + $0x58] sm:$0xf]
        %v1020 = vld [vmem:[%s10 + $0x5c] sm:$0xf]
        %v1021 = vld [vmem:[%s10 + $0x60] sm:$0xf]
        %v1022 = vld [vmem:[%s10 + $0x64] sm:$0xf]
        %v1023 = vld [vmem:[%s10 + $0x68] sm:$0xf]
        %v1024 = vld [vmem:[%s10 + $0x6c] sm:$0xf]
        %v1025 = vld [vmem:[%s10 + $0x70] sm:$0xf]
        %v1026 = vld [vmem:[%s10 + $0x74] sm:$0xf]
        %v1027 = vld [vmem:[%s10 + $0x78] sm:$0xf]
        %v1028 = vld [vmem:[%s10 + $0x7c] sm:$0xf]
        %v1029 = vld [vmem:[%s11] sm:$0x1]
        %v1031 = vperm.slane %v1029, 0
        %v1065 = vunpack.c.l.b16 %v997
        %v1066 = vunpack.c.l.b16 %v998
        %v1067 = vunpack.c.l.b16 %v999
        %v1068 = vunpack.c.l.b16 %v1000
        %v1069 = vunpack.c.l.b16 %v1001
        %v1070 = vunpack.c.l.b16 %v1002
        %v1071 = vunpack.c.l.b16 %v1003
        %v1072 = vunpack.c.l.b16 %v1004
        %v1073 = vunpack.c.l.b16 %v1005
        %v1074 = vunpack.c.l.b16 %v1006
        %v1075 = vunpack.c.l.b16 %v1007
        %v1076 = vunpack.c.l.b16 %v1008
        %v1077 = vunpack.c.l.b16 %v1009
        %v1078 = vunpack.c.l.b16 %v1010
        %v1079 = vunpack.c.l.b16 %v1011
        %v1080 = vunpack.c.l.b16 %v1012
        %v1081 = vunpack.c.l.b16 %v1013
        %v1082 = vunpack.c.l.b16 %v1014
        %v1083 = vunpack.c.l.b16 %v1015
        %v1084 = vunpack.c.l.b16 %v1016
        %v1085 = vunpack.c.l.b16 %v1017
        %v1086 = vunpack.c.l.b16 %v1018
        %v1087 = vunpack.c.l.b16 %v1019
        %v1088 = vunpack.c.l.b16 %v1020
        %v1089 = vunpack.c.l.b16 %v1021
        %v1090 = vunpack.c.l.b16 %v1022
        %v1091 = vunpack.c.l.b16 %v1023
        %v1092 = vunpack.c.l.b16 %v1024
        %v1093 = vunpack.c.l.b16 %v1025
        %v1094 = vunpack.c.l.b16 %v1026
        %v1095 = vunpack.c.l.b16 %v1027
        %v1096 = vunpack.c.l.b16 %v1028
        %v1097 = vpack.c.b16 %v1066, %v1065
        %v1098 = vpack.c.b16 %v1068, %v1067
        %v1099 = vpack.c.b16 %v1070, %v1069
        %v1100 = vpack.c.b16 %v1072, %v1071
        %v1101 = vpack.c.b16 %v1074, %v1073
        %v1102 = vpack.c.b16 %v1076, %v1075
        %v1103 = vpack.c.b16 %v1078, %v1077
        %v1104 = vpack.c.b16 %v1080, %v1079
        %v1105 = vpack.c.b16 %v1082, %v1081
        %v1106 = vpack.c.b16 %v1084, %v1083
        %v1107 = vpack.c.b16 %v1086, %v1085
        %v1108 = vpack.c.b16 %v1088, %v1087
        %v1109 = vpack.c.b16 %v1090, %v1089
        %v1110 = vpack.c.b16 %v1092, %v1091
        %v1111 = vpack.c.b16 %v1094, %v1093
        %v1112 = vpack.c.b16 %v1096, %v1095
        %1129 = vmatpush.bf16.msra.mxu0 %v1104
        %1130 = vmatpush.bf16.msra.mxu0 %v1103
        %1131 = vmatpush.bf16.msra.mxu0 %v1102
        %1132 = vmatpush.bf16.msra.mxu0 %v1101
        %1133 = vmatpush.bf16.msra.mxu0 %v1100
        %1134 = vmatpush.bf16.msra.mxu0 %v1099
        %1135 = vmatpush.bf16.msra.mxu0 %v1098
        %1136 = vmatpush.bf16.msra.mxu0 %v1097
        %1137 = vmatmul.bf16.gmra.mxu0 %v995
        %v1138 = vpop.f32.mrf.mxu0
        %v1139 = vadd.f32 %v1031, %v1138
        %v1140 = vpop.f32.mrf.mxu0
        %1141 = vdwg.mxu0
        %1142 = vmatpush.bf16.msra.mxu0 %v1112
        %1143 = vmatpush.bf16.msra.mxu0 %v1111
        %1144 = vmatpush.bf16.msra.mxu0 %v1110
        %1145 = vmatpush.bf16.msra.mxu0 %v1109
        %1146 = vmatpush.bf16.msra.mxu0 %v1108
        %1147 = vmatpush.bf16.msra.mxu0 %v1107
        %1148 = vmatpush.bf16.msra.mxu0 %v1106
        %1149 = vmatpush.bf16.msra.mxu0 %v1105
        %1150 = vmatmul.bf16.gmra.mxu0 %v996
        %v1151 = vpop.f32.mrf.mxu0
        %v1152 = vadd.f32 %v1139, %v1151
        %v1153 = vpop.f32.mrf.mxu0
        %1154 = vdwg.mxu0
        %v1155 = vmax.f32 %v1152, 0.0
        %v1156 = vadd.f32 %v876, %v1155
        %1157 = vst.msk [vmem:[%s404] sm:$0xff] %vm413, %v1156
        %s1158 = sand.u32 %s291, 1
        %s1159 = scalar_lea.sflag [#allocation3], %s1158
        %s1160 = sand.u32 %s291, 1
        %s1161 = smul.addr %s1160, 8
        %s1162 = scalar_lea.vmem [#allocation2], %s1161
        // Predicated region
        $region69: #{tpu_custom_call.1} parent=67 // pred_check
          %p1163 = pneg %p301
        $region70: #{tpu_custom_call.1} parent=67 // pred_check_branch
          %1165 = sbr.rel (%p1163) target = $region72
        $region71: #{tpu_custom_call.1} parent=67 // pred_region
          %1167 = vsyncadd %s1159, 0
          %s1168 = smul.addr %s26, 8
          %s1169 = scalar_lea.hbm %s12, %s1168
          %s1171 = sshll.u32 %s1162, 4
          %s1172 = int_to_ptr.vmem [resolvable:$true] %s1171
          %s1173 = sshll.u32 %s1169, 4
          %s1174 = int_to_ptr.hbm [resolvable:$true] %s1173
          %1176 = dma.vmem_to_hbm [thread:$0]  %s1172, 128, %s1174, %s1159
        $region72: #{tpu_custom_call.1} parent=67 // pred_fallthru
          _
      $region68: #{tpu_custom_call.1} parent=5 // pred_fallthru
        _
      %p1177 = scmp.le.s32.totalorder 2, %s21
      // Predicated region
      $region73: #{tpu_custom_call.1} parent=5 // pred_check
        %p1178 = pneg %p1177
      $region74: #{tpu_custom_call.1} parent=5 // pred_check_branch
        %1180 = sbr.rel (%p1178) target = $region76
      $region75: #{tpu_custom_call.1} parent=5 // pred_region
        %s1181 = ssub.s32 %s21, 2
        // Predicated region
        $region77: #{tpu_custom_call.1} parent=75 // pred_check
          %p1182 = pneg %p307
        $region78: #{tpu_custom_call.1} parent=75 // pred_check_branch
          %1184 = sbr.rel (%p1182) target = $region80
        $region79: #{tpu_custom_call.1} parent=75 // pred_region
          %s1185 = sand.u32 %s292, 1
          %s1186 = scalar_lea.sflag [#allocation3], %s1185
          %s1187 = sand.u32 %s292, 1
          %s1188 = smul.addr %s1187, 8
          %s1189 = scalar_lea.vmem [#allocation2], %s1188
          %1191 = dma.done %s1186, 128
        $region80: #{tpu_custom_call.1} parent=75 // pred_fallthru
          _
      $region76: #{tpu_custom_call.1} parent=5 // pred_fallthru
        _
    $region6: #{tpu_custom_call.1} parent=1 // loop_footer
      %s25 = sadd.s32 1, %s21
    $region7: #{tpu_custom_call.1} parent=1 // loop_footer_branch
      %20 = sbr.rel target = $region3
    $region8: #{tpu_custom_call.1} parent=1 // loop_exit
      _
    %1192 = vsyncpa [#allocation3], 1
    %s1193 = scalar_lea.sflag [#allocation3], 1
    %1194 = vsyncpa %s1193, 1

</llo_original>
